<compile_context>
chip_gen: v5e
topology: v5e:2x2
jax: 0.10.0
libtpu: 0.0.40
codegen_flags: <defaults>
</compile_context>

<pallas_src>
import functools
import math

import jax
import jax.numpy as jnp
from jax.experimental import pallas as pl
from jax.experimental.pallas import tpu as pltpu


# ---------------------------------------------------------------------------
# Helpers
# ---------------------------------------------------------------------------
def _pick_tile(n, target, align):
    """Largest divisor of `n` that is <= target and a multiple of `align`.
    Falls back to `n` itself (single tile), which is always legal because a
    full-extent block satisfies Mosaic's (8, 128) block constraint."""
    if n <= target:
        return n
    t = (target // align) * align
    while t >= align:
        if n % t == 0:
            return t
        t -= align
    return n


@functools.lru_cache(maxsize=1)
def _vmem_limit_bytes(fraction=0.5, fallback=32 * 1024 * 1024):
    """Scoped-VMEM limit derived from the local chip's physical VMEM so the same
    code leaves pipelining headroom on v5e/v6e (128 MiB) and v7x (64 MiB)."""
    try:
        cap = pltpu.get_tpu_info().vmem_capacity_bytes
        return int(cap * fraction)
    except Exception:  # conservative fallback == default scoped limit
        return fallback


# ---------------------------------------------------------------------------
# Stage 1: hidden matmul + BatchNorm batch-stat partials
# ---------------------------------------------------------------------------
def _mlp_hidden_kernel(x_ref, w1_ref, h_ref, s1_ref, s2_ref):
    """h = x @ W1 (bf16 MXU, f32 accumulate); stores bf16 h and f32 per-tile
    partial sums / sums-of-squares for the training-mode BatchNorm that follows.

    Conv1's bias is omitted on purpose: BatchNorm subtracts the per-channel batch
    mean, so a per-channel bias cancels exactly and would only add cancellation
    error to the one-pass variance estimate."""
    h = jnp.dot(x_ref[...], w1_ref[...], preferred_element_type=jnp.float32)
    h_ref[...] = h.astype(h_ref.dtype)
    s1_ref[...] = jnp.sum(h, axis=0, keepdims=True).reshape(s1_ref.shape)
    s2_ref[...] = jnp.sum(h * h, axis=0, keepdims=True).reshape(s2_ref.shape)


# ---------------------------------------------------------------------------
# Stage 2: BN affine -> ReLU -> @ W2 -> +b2 -> L2 normalize (-> * logit scale)
# ---------------------------------------------------------------------------
def _mlp_out_kernel(h_ref, bnsc_ref, bnsh_ref, w2_ref, b2_ref, scale_ref,
                    out_ref, acc_ref):
    i = pl.program_id(1)

    @pl.when(i == 0)
    def _init():
        acc_ref[...] = jnp.zeros_like(acc_ref)

    hn = h_ref[...].astype(jnp.float32) * bnsc_ref[...] + bnsh_ref[...]
    hn = jnp.maximum(hn, 0.0)
    acc_ref[...] += jnp.dot(hn.astype(jnp.bfloat16), w2_ref[...],
                            preferred_element_type=jnp.float32)

    @pl.when(i == pl.num_programs(1) - 1)
    def _finalize():
        y = acc_ref[...] + b2_ref[...]
        # F.normalize(dim=-1): x / max(||x||, 1e-12)  (rsqrt on the EUP).
        inv = jax.lax.rsqrt(jnp.maximum(jnp.sum(y * y, axis=-1, keepdims=True),
                                        1e-24))
        out_ref[...] = (y * inv * scale_ref[0]).astype(out_ref.dtype)


# ---------------------------------------------------------------------------
# Stage 3: bidirectional CLIP cross-entropy (flash-style online LSE)
# ---------------------------------------------------------------------------
def _clip_loss_kernel(img_ref, txt_ref, loss_ref, m_r, l_r, m_c, l_c, acc):
    """Blocks of L = (scale * img_n) @ txt_n^T.  Row LSE = image->text direction,
    column LSE of the SAME matrix = text->image direction (logits_per_text == L^T),
    diagonal = targets of both.  loss = 0.5*(mean row-LSE + mean col-LSE) - mean diag.

    Two exp passes per block (one per direction) are kept intentionally: reusing
    the row-direction exponentials for the columns needs a shared reference max
    that can underflow to -inf near logit_scale == 100."""
    qi = pl.program_id(0)
    ki = pl.program_id(1)
    n_k = pl.num_programs(1)
    last = jnp.logical_and(qi == pl.num_programs(0) - 1, ki == n_k - 1)

    @pl.when(jnp.logical_and(qi == 0, ki == 0))
    def _init_global():
        m_c[...] = jnp.full_like(m_c, -jnp.inf)
        l_c[...] = jnp.zeros_like(l_c)
        acc[0] = jnp.float32(0.0)   # sum of row log-sum-exps
        acc[1] = jnp.float32(0.0)   # sum of diagonal (target) logits

    @pl.when(ki == 0)
    def _init_rows():
        m_r[...] = jnp.full_like(m_r, -jnp.inf)
        l_r[...] = jnp.zeros_like(l_r)

    a = img_ref[...]                 # [tq, D] bf16, already * clamp(exp(logit_scale), 100)
    b = txt_ref[...]                 # [tk, D] bf16
    # A @ B^T with f32 MXU accumulation (flash-attention-standard contraction; if this
    # ever becomes XLU-bound at large B, check pl.lower_as_mlir for a vxpose of `b`).
    s = jax.lax.dot_general(a, b, (((1,), (1,)), ((), ())),
                            preferred_element_type=jnp.float32)

    # --- image -> text: per-row online LSE --------------------------------
    m_new = jnp.maximum(m_r[...], jnp.max(s, axis=1, keepdims=True))
    l_r[...] = (jnp.exp(m_r[...] - m_new) * l_r[...]
                + jnp.sum(jnp.exp(s - m_new), axis=1, keepdims=True))
    m_r[...] = m_new

    # --- text -> image: per-column online LSE (this k-tile's column slice) ---
    sl = pl.ds(ki, 1)
    mc_old = m_c[sl, :]
    mc_new = jnp.maximum(mc_old, jnp.max(s, axis=0, keepdims=True))
    l_c[sl, :] = (jnp.exp(mc_old - mc_new) * l_c[sl, :]
                  + jnp.sum(jnp.exp(s - mc_new), axis=0, keepdims=True))
    m_c[sl, :] = mc_new

    # --- diagonal targets: only the qi == ki blocks (tq == tk) -------------
    @pl.when(qi == ki)
    def _diag():
        # rows/cols of this block share indices -> full elementwise sum == trace.
        acc[1] = acc[1] + jnp.sum(a.astype(jnp.float32) * b.astype(jnp.float32))

    # --- row finalize at the end of each q-strip ---------------------------
    @pl.when(ki == n_k - 1)
    def _rows_done():
        acc[0] = acc[0] + jnp.sum(m_r[...] + jnp.log(l_r[...]))

    # --- loss finalize at the very last grid step --------------------------
    @pl.when(last)
    def _loss_done():
        col_sum = jnp.sum(m_c[...] + jnp.log(l_c[...]))
        inv_b = 1.0 / jnp.float32(m_c.shape[0] * m_c.shape[1])
        loss_ref[0, 0] = (0.5 * (acc[0] + col_sum) - acc[1]) * inv_b


# ---------------------------------------------------------------------------
# Wrappers
# ---------------------------------------------------------------------------
def _project_mlp(x, params, scale, *, block_b=None, block_i=None):
    """ProjectMLP (Conv1d k=1 -> BatchNorm1d train-mode -> ReLU -> Conv1d k=1)
    followed by F.normalize and an optional logit-scale fold.  Tiled over
    (batch, inner); h streamed through HBM in bf16."""
    B, c_in = x.shape
    inner = params["w1"].shape[1]
    d_out = params["w2"].shape[1]
    tb = block_b if (block_b and B % block_b == 0) else _pick_tile(B, 256, 8)
    ti = block_i if (block_i and inner % block_i == 0) else _pick_tile(inner, 512, 128)
    n_b, n_i = B // tb, inner // ti
    vmem = _vmem_limit_bytes()

    x = x.astype(jnp.bfloat16)   # no zero-padding of activations (Mosaic pads layout)

    # ---- stage 1 -----------------------------------------------------------
    h, s1, s2 = pl.pallas_call(
        _mlp_hidden_kernel,
        grid=(n_b, n_i),
        in_specs=[
            pl.BlockSpec((tb, c_in), lambda b, i: (b, 0)),
            pl.BlockSpec((c_in, ti), lambda b, i: (0, i)),
        ],
        out_specs=[
            pl.BlockSpec((tb, ti), lambda b, i: (b, i)),
            pl.BlockSpec((1, 1, ti), lambda b, i: (b, 0, i)),
            pl.BlockSpec((1, 1, ti), lambda b, i: (b, 0, i)),
        ],
        out_shape=[
            jax.ShapeDtypeStruct((B, inner), jnp.bfloat16),
            jax.ShapeDtypeStruct((n_b, 1, inner), jnp.float32),
            jax.ShapeDtypeStruct((n_b, 1, inner), jnp.float32),
        ],
        compiler_params=pltpu.CompilerParams(
            dimension_semantics=("parallel", "parallel"),
            vmem_limit_bytes=vmem),
        cost_estimate=pl.CostEstimate(
            flops=2 * B * c_in * inner, transcendentals=0,
            bytes_accessed=2 * (B * c_in + c_in * inner + B * inner)
            + 8 * n_b * inner),
    )(x, params["w1"])

    # ---- training-mode BatchNorm stats (tiny O(inner) XLA glue) ------------
    # One-pass variance E[h^2]-E[h]^2 in f32; the bias term that would amplify
    # cancellation is already removed (see _mlp_hidden_kernel docstring).
    mean = s1.sum(axis=(0, 1)) * (1.0 / B)
    var = jnp.maximum(s2.sum(axis=(0, 1)) * (1.0 / B) - mean * mean, 0.0)
    inv_std = jax.lax.rsqrt(var + 1e-5)
    bn_scale = params["gamma"] * inv_std           # [1, inner] f32
    bn_shift = params["beta"] - mean * bn_scale    # [1, inner] f32

    # ---- stage 2 -----------------------------------------------------------
    feat = pl.pallas_call(
        _mlp_out_kernel,
        grid=(n_b, n_i),
        in_specs=[
            pl.BlockSpec((tb, ti), lambda b, i: (b, i)),
            pl.BlockSpec((1, ti), lambda b, i: (0, i)),
            pl.BlockSpec((1, ti), lambda b, i: (0, i)),
            pl.BlockSpec((ti, d_out), lambda b, i: (i, 0)),
            pl.BlockSpec((1, d_out), lambda b, i: (0, 0)),
            pl.BlockSpec(memory_space=pltpu.MemorySpace.SMEM),
        ],
        out_specs=pl.BlockSpec((tb, d_out), lambda b, i: (b, 0)),
        out_shape=jax.ShapeDtypeStruct((B, d_out), jnp.bfloat16),
        scratch_shapes=[pltpu.VMEM((tb, d_out), jnp.float32)],
        compiler_params=pltpu.CompilerParams(
            dimension_semantics=("parallel", "arbitrary"),
            vmem_limit_bytes=vmem),
        cost_estimate=pl.CostEstimate(
            flops=2 * B * inner * d_out, transcendentals=B,
            bytes_accessed=2 * (B * inner + inner * d_out + B * d_out)
            + 8 * inner),
    )(h, bn_scale, bn_shift, params["w2"], params["b2"], scale)
    return feat


def _clip_loss(img_scaled, txt_n, *, block_b=None):
    """Bidirectional CLIP cross-entropy against diagonal labels, one pallas_call."""
    B, d = img_scaled.shape
    t = block_b if (block_b and B % block_b == 0) else _pick_tile(B, 256, 8)
    n = B // t
    loss = pl.pallas_call(
        _clip_loss_kernel,
        grid=(n, n),
        in_specs=[
            pl.BlockSpec((t, d), lambda qi, ki: (qi, 0)),
            pl.BlockSpec((t, d), lambda qi, ki: (ki, 0)),
        ],
        out_specs=pl.BlockSpec(memory_space=pltpu.MemorySpace.SMEM),
        out_shape=jax.ShapeDtypeStruct((1, 1), jnp.float32),
        scratch_shapes=[
            pltpu.VMEM((t, 1), jnp.float32),   # m_r : per-row running max
            pltpu.VMEM((t, 1), jnp.float32),   # l_r : per-row running sum(exp)
            pltpu.VMEM((n, t), jnp.float32),   # m_c : per-column running max
            pltpu.VMEM((n, t), jnp.float32),   # l_c : per-column running sum(exp)
            pltpu.SMEM((2,), jnp.float32),     # [sum(row lse), sum(diag)]
        ],
        compiler_params=pltpu.CompilerParams(
            # Both axes carry cross-iteration accumulators (row LSE over ki,
            # column LSE over qi) so they stay sequential; v7x dual-TC parallelism
            # is taken on the (much heavier) ProjectMLP stages.
            dimension_semantics=("arbitrary", "arbitrary"),
            vmem_limit_bytes=_vmem_limit_bytes()),
        cost_estimate=pl.CostEstimate(
            flops=2 * B * B * d, transcendentals=2 * B * B + 2 * B,
            bytes_accessed=2 * B * d * (n + 1) + 4),
    )(img_scaled, txt_n)
    return loss[0, 0]


def multi_label_contrastive_forward(image_feat, text_feat, img_proj, txt_proj,
                                    logit_scale, *, block_b=None, block_i=None):
    """forward_train with the default flags: projectors + contrastive loss.
    Single-device view of dist_collect / SyncBatchNorm (world_size == 1, rank 0)."""
    # torch.clamp(logit_scale.exp(), max=100); folded into the image features so the
    # [B, B] logits come out of the MXU already scaled (logits_per_text == logits^T).
    scale = jnp.minimum(jnp.exp(logit_scale.astype(jnp.float32)), 100.0)
    img_scale = jnp.reshape(scale, (1,))
    txt_scale = jnp.ones((1,), jnp.float32)

    img_n = _project_mlp(image_feat, img_proj, img_scale,
                         block_b=block_b, block_i=block_i)
    txt_n = _project_mlp(text_feat, txt_proj, txt_scale,
                         block_b=block_b, block_i=block_i)
    loss = _clip_loss(img_n, txt_n, block_b=block_b)
    return {"loss": loss}


# ---------------------------------------------------------------------------
# Parameter init (Conv1d default uniform init, BN init) and one-time prep.
# Conv1d weight [C_out, C_in, 1] is stored transposed as [C_in, C_out].
# ---------------------------------------------------------------------------
def init_project_mlp(key, in_dim, inner_dim, out_dim):
    k1, k2, k3, k4 = jax.random.split(key, 4)
    lim1 = 1.0 / math.sqrt(in_dim)
    lim2 = 1.0 / math.sqrt(inner_dim)
    return dict(
        w1=jax.random.uniform(k1, (in_dim, inner_dim), jnp.float32, -lim1, lim1),
        b1=jax.random.uniform(k2, (1, inner_dim), jnp.float32, -lim1, lim1),
        gamma=jnp.ones((1, inner_dim), jnp.float32),
        beta=jnp.zeros((1, inner_dim), jnp.float32),
        w2=jax.random.uniform(k3, (inner_dim, out_dim), jnp.float32, -lim2, lim2),
        b2=jax.random.uniform(k4, (1, out_dim), jnp.float32, -lim2, lim2),
    )


def prepare_proj_params(p):
    """One-time (not per-step) prep: matmul weights in bf16 (halves weight DMA and
    VMEM residency), BN/bias terms in f32.  Conv1's bias b1 is dropped because
    training-mode BatchNorm's mean subtraction cancels it exactly."""
    return dict(
        w1=p["w1"].astype(jnp.bfloat16),
        gamma=p["gamma"].astype(jnp.float32),
        beta=p["beta"].astype(jnp.float32),
        w2=p["w2"].astype(jnp.bfloat16),
        b2=p["b2"].astype(jnp.float32),
    )


if __name__ == "__main__":
    key = jax.random.PRNGKey(0)
    B = 16           # batch (global, i.e. already dist_collect'ed; world_size == 1)
    img_width = 32   # img_encoder.width  (stand-in; backbone not modeled)
    txt_width = 48   # text_encoder.width (stand-in)
    inner_dim = 256  # ProjectMLP inner dim (scaled down from 4096)
    out_dim = 128    # output_dim          (scaled down from 256)

    k_img, k_txt, k_pi, k_pt = jax.random.split(key, 4)
    image_feat = jax.random.normal(k_img, (B, img_width), jnp.float32)
    text_feat = jax.random.normal(k_txt, (B, txt_width), jnp.float32)

    img_proj = prepare_proj_params(init_project_mlp(k_pi, img_width, inner_dim, out_dim))
    txt_proj = prepare_proj_params(init_project_mlp(k_pt, txt_width, inner_dim, out_dim))
    # logit_scale = log(1 / contrast_temperature), contrast_temperature = 0.07
    logit_scale = jnp.array(math.log(1.0 / 0.07), dtype=jnp.float32)

    # Small block sizes so the smoke test exercises multi-tile grids and the
    # online/accumulator code paths (production: leave None -> 256 / 512 tiles,
    # re-derived per TPU generation and batch size).
    fwd = jax.jit(functools.partial(multi_label_contrastive_forward,
                                    block_b=8, block_i=128))
    out = fwd(image_feat, text_feat, img_proj, txt_proj, logit_scale)
    jax.block_until_ready(out["loss"])
    print("KERNEL_OK")
</pallas_src>

<mosaic_0001>
module attributes {stable_mosaic.version = 11 : i64} {
  func.func @_mlp_hidden_kernel(%arg0: i32, %arg1: i32, %arg2: memref<8x48xbf16, #tpu.memory_space<vmem>>, %arg3: memref<48x128xbf16, #tpu.memory_space<vmem>>, %arg4: memref<8x128xbf16, #tpu.memory_space<vmem>>, %arg5: memref<1x1x128xf32, #tpu.memory_space<vmem>>, %arg6: memref<1x1x128xf32, #tpu.memory_space<vmem>>) attributes {dimension_semantics = [#tpu.dimension_semantics<parallel>, #tpu.dimension_semantics<parallel>], iteration_bounds = array<i64: 2, 2>, scalar_prefetch = 0 : i64, scratch_operands = 0 : i64, tpu.core_type = #tpu.core_type<tc>, window_params = [{transform_indices = @transform_0, window_bounds = array<i64: 8, 48>}, {transform_indices = @transform_1, window_bounds = array<i64: 48, 128>}, {transform_indices = @transform_2, window_bounds = array<i64: 8, 128>}, {transform_indices = @transform_3, window_bounds = array<i64: 1, 1, 128>}, {transform_indices = @transform_4, window_bounds = array<i64: 1, 1, 128>}]} {
    %c0 = arith.constant 0 : index
    %c0_0 = arith.constant 0 : index
    %0 = vector.load %arg2[%c0, %c0_0] : memref<8x48xbf16, #tpu.memory_space<vmem>>, vector<8x48xbf16>
    %c0_1 = arith.constant 0 : index
    %c0_2 = arith.constant 0 : index
    %1 = vector.load %arg3[%c0_1, %c0_2] : memref<48x128xbf16, #tpu.memory_space<vmem>>, vector<48x128xbf16>
    %cst = arith.constant dense<0.000000e+00> : vector<8x128xf32>
    %2 = tpu.matmul %0, %1, %cst {dimension_numbers = #tpu.dot_dimension_numbers<[1], [0], [0], [1], [0, 0, 1, 1], [], []>} : vector<8x48xbf16>, vector<48x128xbf16>, vector<8x128xf32> -> vector<8x128xf32>
    %3 = arith.truncf %2 : vector<8x128xf32> to vector<8x128xbf16>
    %c0_3 = arith.constant 0 : index
    %c0_4 = arith.constant 0 : index
    %4 = vector.load %arg4[%c0_3, %c0_4] : memref<8x128xbf16, #tpu.memory_space<vmem>>, vector<8x128xbf16>
    tpu.vector_store %arg4[%c0_3, %c0_4], %3 {strides = array<i32>} : memref<8x128xbf16, #tpu.memory_space<vmem>>, vector<8x128xbf16>,
    %cst_5 = arith.constant dense<0.000000e+00> : vector<128xf32>
    %5 = vector.multi_reduction <add>, %2, %cst_5 [0] : vector<8x128xf32> to vector<128xf32>
    %6 = vector.shape_cast %5 : vector<128xf32> to vector<1x128xf32>
    %7 = vector.shape_cast %6 : vector<1x128xf32> to vector<1x1x128xf32>
    %c0_6 = arith.constant 0 : index
    %c0_7 = arith.constant 0 : index
    %c0_8 = arith.constant 0 : index
    %8 = vector.load %arg5[%c0_6, %c0_7, %c0_8] : memref<1x1x128xf32, #tpu.memory_space<vmem>>, vector<1x1x128xf32>
    tpu.vector_store %arg5[%c0_6, %c0_7, %c0_8], %7 {strides = array<i32>} : memref<1x1x128xf32, #tpu.memory_space<vmem>>, vector<1x1x128xf32>,
    %9 = arith.mulf %2, %2 : vector<8x128xf32>
    %cst_9 = arith.constant dense<0.000000e+00> : vector<128xf32>
    %10 = vector.multi_reduction <add>, %9, %cst_9 [0] : vector<8x128xf32> to vector<128xf32>
    %11 = vector.shape_cast %10 : vector<128xf32> to vector<1x128xf32>
    %12 = vector.shape_cast %11 : vector<1x128xf32> to vector<1x1x128xf32>
    %c0_10 = arith.constant 0 : index
    %c0_11 = arith.constant 0 : index
    %c0_12 = arith.constant 0 : index
    %13 = vector.load %arg6[%c0_10, %c0_11, %c0_12] : memref<1x1x128xf32, #tpu.memory_space<vmem>>, vector<1x1x128xf32>
    tpu.vector_store %arg6[%c0_10, %c0_11, %c0_12], %12 {strides = array<i32>} : memref<1x1x128xf32, #tpu.memory_space<vmem>>, vector<1x1x128xf32>,
    return
  }
  func.func @transform_0(%arg0: i32, %arg1: i32) -> (i32, i32) {
    %c0_i32 = arith.constant 0 : i32
    %c0_i32_0 = arith.constant 0 : i32
    return %arg0, %c0_i32 : i32, i32
  }
  func.func @transform_1(%arg0: i32, %arg1: i32) -> (i32, i32) {
    %c0_i32 = arith.constant 0 : i32
    %c0_i32_0 = arith.constant 0 : i32
    return %c0_i32, %arg1 : i32, i32
  }
  func.func @transform_2(%arg0: i32, %arg1: i32) -> (i32, i32) {
    %c0_i32 = arith.constant 0 : i32
    return %arg0, %arg1 : i32, i32
  }
  func.func @transform_3(%arg0: i32, %arg1: i32) -> (i32, i32, i32) {
    %c0_i32 = arith.constant 0 : i32
    %c0_i32_0 = arith.constant 0 : i32
    return %arg0, %c0_i32, %arg1 : i32, i32, i32
  }
  func.func @transform_4(%arg0: i32, %arg1: i32) -> (i32, i32, i32) {
    %c0_i32 = arith.constant 0 : i32
    %c0_i32_0 = arith.constant 0 : i32
    return %arg0, %c0_i32, %arg1 : i32, i32, i32
  }
}

module attributes {stable_mosaic.version = 11 : i64} {
  func.func @_mlp_out_kernel(%arg0: i32, %arg1: i32, %arg2: memref<8x128xbf16, #tpu.memory_space<vmem>>, %arg3: memref<1x128xf32, #tpu.memory_space<vmem>>, %arg4: memref<1x128xf32, #tpu.memory_space<vmem>>, %arg5: memref<128x128xbf16, #tpu.memory_space<vmem>>, %arg6: memref<1x128xf32, #tpu.memory_space<vmem>>, %arg7: memref<1xf32, #tpu.memory_space<smem>>, %arg8: memref<8x128xbf16, #tpu.memory_space<vmem>>, %arg9: memref<8x128xf32, #tpu.memory_space<vmem>>) attributes {dimension_semantics = [#tpu.dimension_semantics<parallel>, #tpu.dimension_semantics<arbitrary>], iteration_bounds = array<i64: 2, 2>, scalar_prefetch = 0 : i64, scratch_operands = 1 : i64, tpu.core_type = #tpu.core_type<tc>, window_params = [{transform_indices = @transform_0, window_bounds = array<i64: 8, 128>}, {transform_indices = @transform_1, window_bounds = array<i64: 1, 128>}, {transform_indices = @transform_2, window_bounds = array<i64: 1, 128>}, {transform_indices = @transform_3, window_bounds = array<i64: 128, 128>}, {pipeline_mode = #tpu.pipeline_mode<synchronous>, transform_indices = @transform_4, window_bounds = array<i64: 1, 128>}, {transform_indices = @transform_5, window_bounds = array<i64: 1>}, {transform_indices = @transform_6, window_bounds = array<i64: 8, 128>}]} {
    %c0_i32 = arith.constant 0 : i32
    %0 = arith.cmpi eq, %arg1, %c0_i32 : i32
    %1 = arith.extui %0 : i1 to i32
    %c0_i32_0 = arith.constant 0 : i32
    %2 = arith.cmpi ne, %1, %c0_i32_0 : i32
    scf.if %2 {
      %cst_14 = arith.constant 0.000000e+00 : f32
      %22 = vector.broadcast %cst_14 : f32 to vector<8x128xf32>
      %c0_15 = arith.constant 0 : index
      %c0_16 = arith.constant 0 : index
      %23 = vector.load %arg9[%c0_15, %c0_16] : memref<8x128xf32, #tpu.memory_space<vmem>>, vector<8x128xf32>
      tpu.vector_store %arg9[%c0_15, %c0_16], %22 {strides = array<i32>} : memref<8x128xf32, #tpu.memory_space<vmem>>, vector<8x128xf32>,
    } else {
    }
    %c0 = arith.constant 0 : index
    %c0_1 = arith.constant 0 : index
    %3 = vector.load %arg2[%c0, %c0_1] : memref<8x128xbf16, #tpu.memory_space<vmem>>, vector<8x128xbf16>
    %4 = arith.extf %3 : vector<8x128xbf16> to vector<8x128xf32>
    %c0_2 = arith.constant 0 : index
    %c0_3 = arith.constant 0 : index
    %5 = vector.load %arg3[%c0_2, %c0_3] : memref<1x128xf32, #tpu.memory_space<vmem>>, vector<1x128xf32>
    %6 = vector.broadcast %5 : vector<1x128xf32> to vector<8x128xf32>
    %7 = arith.mulf %4, %6 : vector<8x128xf32>
    %c0_4 = arith.constant 0 : index
    %c0_5 = arith.constant 0 : index
    %8 = vector.load %arg4[%c0_4, %c0_5] : memref<1x128xf32, #tpu.memory_space<vmem>>, vector<1x128xf32>
    %9 = vector.broadcast %8 : vector<1x128xf32> to vector<8x128xf32>
    %10 = arith.addf %7, %9 : vector<8x128xf32>
    %cst = arith.constant 0.000000e+00 : f32
    %11 = vector.broadcast %cst : f32 to vector<8x128xf32>
    %12 = arith.maximumf %10, %11 : vector<8x128xf32>
    %c0_6 = arith.constant 0 : index
    %c0_7 = arith.constant 0 : index
    %13 = vector.load %arg9[%c0_6, %c0_7] : memref<8x128xf32, #tpu.memory_space<vmem>>, vector<8x128xf32>
    %14 = arith.truncf %12 : vector<8x128xf32> to vector<8x128xbf16>
    %c0_8 = arith.constant 0 : index
    %c0_9 = arith.constant 0 : index
    %15 = vector.load %arg5[%c0_8, %c0_9] : memref<128x128xbf16, #tpu.memory_space<vmem>>, vector<128x128xbf16>
    %cst_10 = arith.constant dense<0.000000e+00> : vector<8x128xf32>
    %16 = tpu.matmul %14, %15, %cst_10 {dimension_numbers = #tpu.dot_dimension_numbers<[1], [0], [0], [1], [0, 0, 1, 1], [], []>} : vector<8x128xbf16>, vector<128x128xbf16>, vector<8x128xf32> -> vector<8x128xf32>
    %17 = arith.addf %13, %16 : vector<8x128xf32>
    %c0_11 = arith.constant 0 : index
    %c0_12 = arith.constant 0 : index
    %18 = vector.load %arg9[%c0_11, %c0_12] : memref<8x128xf32, #tpu.memory_space<vmem>>, vector<8x128xf32>
    tpu.vector_store %arg9[%c0_11, %c0_12], %17 {strides = array<i32>} : memref<8x128xf32, #tpu.memory_space<vmem>>, vector<8x128xf32>,
    %c1_i32 = arith.constant 1 : i32
    %19 = arith.cmpi eq, %arg1, %c1_i32 : i32
    %20 = arith.extui %19 : i1 to i32
    %c0_i32_13 = arith.constant 0 : i32
    %21 = arith.cmpi ne, %20, %c0_i32_13 : i32
    scf.if %21 {
      %c0_14 = arith.constant 0 : index
      %c0_15 = arith.constant 0 : index
      %22 = vector.load %arg9[%c0_14, %c0_15] : memref<8x128xf32, #tpu.memory_space<vmem>>, vector<8x128xf32>
      %c0_16 = arith.constant 0 : index
      %c0_17 = arith.constant 0 : index
      %23 = vector.load %arg6[%c0_16, %c0_17] : memref<1x128xf32, #tpu.memory_space<vmem>>, vector<1x128xf32>
      %24 = vector.broadcast %23 : vector<1x128xf32> to vector<8x128xf32>
      %25 = arith.addf %22, %24 : vector<8x128xf32>
      %26 = arith.mulf %25, %25 : vector<8x128xf32>
      %cst_18 = arith.constant dense<0.000000e+00> : vector<8xf32>
      %27 = vector.multi_reduction <add>, %26, %cst_18 [1] : vector<8x128xf32> to vector<8xf32>
      %28 = vector.shape_cast %27 : vector<8xf32> to vector<8x1xf32>
      %cst_19 = arith.constant 1.000000e-24 : f32
      %29 = vector.broadcast %cst_19 : f32 to vector<8x1xf32>
      %30 = arith.maximumf %28, %29 : vector<8x1xf32>
      %31 = math.rsqrt %30 : vector<8x1xf32>
      %32 = vector.broadcast %31 : vector<8x1xf32> to vector<8x128xf32>
      %33 = arith.mulf %25, %32 : vector<8x128xf32>
      %c0_20 = arith.constant 0 : index
      %34 = memref.load %arg7[%c0_20] : memref<1xf32, #tpu.memory_space<smem>>
      %35 = vector.broadcast %34 : f32 to vector<8x128xf32>
      %36 = arith.mulf %33, %35 : vector<8x128xf32>
      %37 = arith.truncf %36 : vector<8x128xf32> to vector<8x128xbf16>
      %c0_21 = arith.constant 0 : index
      %c0_22 = arith.constant 0 : index
      %38 = vector.load %arg8[%c0_21, %c0_22] : memref<8x128xbf16, #tpu.memory_space<vmem>>, vector<8x128xbf16>
      tpu.vector_store %arg8[%c0_21, %c0_22], %37 {strides = array<i32>} : memref<8x128xbf16, #tpu.memory_space<vmem>>, vector<8x128xbf16>,
    } else {
    }
    return
  }
  func.func @transform_0(%arg0: i32, %arg1: i32) -> (i32, i32) {
    %c0_i32 = arith.constant 0 : i32
    return %arg0, %arg1 : i32, i32
  }
  func.func @transform_1(%arg0: i32, %arg1: i32) -> (i32, i32) {
    %c0_i32 = arith.constant 0 : i32
    %c0_i32_0 = arith.constant 0 : i32
    return %c0_i32, %arg1 : i32, i32
  }
  func.func @transform_2(%arg0: i32, %arg1: i32) -> (i32, i32) {
    %c0_i32 = arith.constant 0 : i32
    %c0_i32_0 = arith.constant 0 : i32
    return %c0_i32, %arg1 : i32, i32
  }
  func.func @transform_3(%arg0: i32, %arg1: i32) -> (i32, i32) {
    %c0_i32 = arith.constant 0 : i32
    %c0_i32_0 = arith.constant 0 : i32
    return %arg1, %c0_i32 : i32, i32
  }
  func.func @transform_4(%arg0: i32, %arg1: i32) -> (i32, i32) {
    %c0_i32 = arith.constant 0 : i32
    %c0_i32_0 = arith.constant 0 : i32
    %c0_i32_1 = arith.constant 0 : i32
    return %c0_i32, %c0_i32_0 : i32, i32
  }
  func.func @transform_5(%arg0: i32, %arg1: i32) -> i32 {
    %c0_i32 = arith.constant 0 : i32
    %c0_i32_0 = arith.constant 0 : i32
    return %c0_i32 : i32
  }
  func.func @transform_6(%arg0: i32, %arg1: i32) -> (i32, i32) {
    %c0_i32 = arith.constant 0 : i32
    %c0_i32_0 = arith.constant 0 : i32
    return %arg0, %c0_i32 : i32, i32
  }
}

module attributes {stable_mosaic.version = 11 : i64} {
  func.func @_mlp_hidden_kernel(%arg0: i32, %arg1: i32, %arg2: memref<8x32xbf16, #tpu.memory_space<vmem>>, %arg3: memref<32x128xbf16, #tpu.memory_space<vmem>>, %arg4: memref<8x128xbf16, #tpu.memory_space<vmem>>, %arg5: memref<1x1x128xf32, #tpu.memory_space<vmem>>, %arg6: memref<1x1x128xf32, #tpu.memory_space<vmem>>) attributes {dimension_semantics = [#tpu.dimension_semantics<parallel>, #tpu.dimension_semantics<parallel>], iteration_bounds = array<i64: 2, 2>, scalar_prefetch = 0 : i64, scratch_operands = 0 : i64, tpu.core_type = #tpu.core_type<tc>, window_params = [{transform_indices = @transform_0, window_bounds = array<i64: 8, 32>}, {transform_indices = @transform_1, window_bounds = array<i64: 32, 128>}, {transform_indices = @transform_2, window_bounds = array<i64: 8, 128>}, {transform_indices = @transform_3, window_bounds = array<i64: 1, 1, 128>}, {transform_indices = @transform_4, window_bounds = array<i64: 1, 1, 128>}]} {
    %c0 = arith.constant 0 : index
    %c0_0 = arith.constant 0 : index
    %0 = vector.load %arg2[%c0, %c0_0] : memref<8x32xbf16, #tpu.memory_space<vmem>>, vector<8x32xbf16>
    %c0_1 = arith.constant 0 : index
    %c0_2 = arith.constant 0 : index
    %1 = vector.load %arg3[%c0_1, %c0_2] : memref<32x128xbf16, #tpu.memory_space<vmem>>, vector<32x128xbf16>
    %cst = arith.constant dense<0.000000e+00> : vector<8x128xf32>
    %2 = tpu.matmul %0, %1, %cst {dimension_numbers = #tpu.dot_dimension_numbers<[1], [0], [0], [1], [0, 0, 1, 1], [], []>} : vector<8x32xbf16>, vector<32x128xbf16>, vector<8x128xf32> -> vector<8x128xf32>
    %3 = arith.truncf %2 : vector<8x128xf32> to vector<8x128xbf16>
    %c0_3 = arith.constant 0 : index
    %c0_4 = arith.constant 0 : index
    %4 = vector.load %arg4[%c0_3, %c0_4] : memref<8x128xbf16, #tpu.memory_space<vmem>>, vector<8x128xbf16>
    tpu.vector_store %arg4[%c0_3, %c0_4], %3 {strides = array<i32>} : memref<8x128xbf16, #tpu.memory_space<vmem>>, vector<8x128xbf16>,
    %cst_5 = arith.constant dense<0.000000e+00> : vector<128xf32>
    %5 = vector.multi_reduction <add>, %2, %cst_5 [0] : vector<8x128xf32> to vector<128xf32>
    %6 = vector.shape_cast %5 : vector<128xf32> to vector<1x128xf32>
    %7 = vector.shape_cast %6 : vector<1x128xf32> to vector<1x1x128xf32>
    %c0_6 = arith.constant 0 : index
    %c0_7 = arith.constant 0 : index
    %c0_8 = arith.constant 0 : index
    %8 = vector.load %arg5[%c0_6, %c0_7, %c0_8] : memref<1x1x128xf32, #tpu.memory_space<vmem>>, vector<1x1x128xf32>
    tpu.vector_store %arg5[%c0_6, %c0_7, %c0_8], %7 {strides = array<i32>} : memref<1x1x128xf32, #tpu.memory_space<vmem>>, vector<1x1x128xf32>,
    %9 = arith.mulf %2, %2 : vector<8x128xf32>
    %cst_9 = arith.constant dense<0.000000e+00> : vector<128xf32>
    %10 = vector.multi_reduction <add>, %9, %cst_9 [0] : vector<8x128xf32> to vector<128xf32>
    %11 = vector.shape_cast %10 : vector<128xf32> to vector<1x128xf32>
    %12 = vector.shape_cast %11 : vector<1x128xf32> to vector<1x1x128xf32>
    %c0_10 = arith.constant 0 : index
    %c0_11 = arith.constant 0 : index
    %c0_12 = arith.constant 0 : index
    %13 = vector.load %arg6[%c0_10, %c0_11, %c0_12] : memref<1x1x128xf32, #tpu.memory_space<vmem>>, vector<1x1x128xf32>
    tpu.vector_store %arg6[%c0_10, %c0_11, %c0_12], %12 {strides = array<i32>} : memref<1x1x128xf32, #tpu.memory_space<vmem>>, vector<1x1x128xf32>,
    return
  }
  func.func @transform_0(%arg0: i32, %arg1: i32) -> (i32, i32) {
    %c0_i32 = arith.constant 0 : i32
    %c0_i32_0 = arith.constant 0 : i32
    return %arg0, %c0_i32 : i32, i32
  }
  func.func @transform_1(%arg0: i32, %arg1: i32) -> (i32, i32) {
    %c0_i32 = arith.constant 0 : i32
    %c0_i32_0 = arith.constant 0 : i32
    return %c0_i32, %arg1 : i32, i32
  }
  func.func @transform_2(%arg0: i32, %arg1: i32) -> (i32, i32) {
    %c0_i32 = arith.constant 0 : i32
    return %arg0, %arg1 : i32, i32
  }
  func.func @transform_3(%arg0: i32, %arg1: i32) -> (i32, i32, i32) {
    %c0_i32 = arith.constant 0 : i32
    %c0_i32_0 = arith.constant 0 : i32
    return %arg0, %c0_i32, %arg1 : i32, i32, i32
  }
  func.func @transform_4(%arg0: i32, %arg1: i32) -> (i32, i32, i32) {
    %c0_i32 = arith.constant 0 : i32
    %c0_i32_0 = arith.constant 0 : i32
    return %arg0, %c0_i32, %arg1 : i32, i32, i32
  }
}

module attributes {stable_mosaic.version = 11 : i64} {
  func.func @_clip_loss_kernel(%arg0: i32, %arg1: i32, %arg2: memref<8x128xbf16, #tpu.memory_space<vmem>>, %arg3: memref<8x128xbf16, #tpu.memory_space<vmem>>, %arg4: memref<1x1xf32, #tpu.memory_space<smem>>, %arg5: memref<8x1xf32, #tpu.memory_space<vmem>>, %arg6: memref<8x1xf32, #tpu.memory_space<vmem>>, %arg7: memref<2x8xf32, #tpu.memory_space<vmem>>, %arg8: memref<2x8xf32, #tpu.memory_space<vmem>>, %arg9: memref<2xf32, #tpu.memory_space<smem>>) attributes {dimension_semantics = [#tpu.dimension_semantics<arbitrary>, #tpu.dimension_semantics<arbitrary>], iteration_bounds = array<i64: 2, 2>, scalar_prefetch = 0 : i64, scratch_operands = 5 : i64, tpu.core_type = #tpu.core_type<tc>, window_params = [{transform_indices = @transform_0, window_bounds = array<i64: 8, 128>}, {transform_indices = @transform_1, window_bounds = array<i64: 8, 128>}, {transform_indices = @transform_2, window_bounds = array<i64: 1, 1>}]} {
    %c1_i32 = arith.constant 1 : i32
    %0 = arith.cmpi eq, %arg0, %c1_i32 : i32
    %c1_i32_0 = arith.constant 1 : i32
    %1 = arith.cmpi eq, %arg1, %c1_i32_0 : i32
    %2 = arith.andi %0, %1 : i1
    %c0_i32 = arith.constant 0 : i32
    %3 = arith.cmpi eq, %arg0, %c0_i32 : i32
    %c0_i32_1 = arith.constant 0 : i32
    %4 = arith.cmpi eq, %arg1, %c0_i32_1 : i32
    %5 = arith.andi %3, %4 : i1
    %6 = arith.extui %5 : i1 to i32
    %c0_i32_2 = arith.constant 0 : i32
    %7 = arith.cmpi ne, %6, %c0_i32_2 : i32
    scf.if %7 {
      %cst_30 = arith.constant 0xFF800000 : f32
      %59 = vector.broadcast %cst_30 : f32 to vector<2x8xf32>
      %c0_31 = arith.constant 0 : index
      %c0_32 = arith.constant 0 : index
      %60 = vector.load %arg7[%c0_31, %c0_32] : memref<2x8xf32, #tpu.memory_space<vmem>>, vector<2x8xf32>
      tpu.vector_store %arg7[%c0_31, %c0_32], %59 {strides = array<i32>} : memref<2x8xf32, #tpu.memory_space<vmem>>, vector<2x8xf32>,
      %cst_33 = arith.constant 0.000000e+00 : f32
      %61 = vector.broadcast %cst_33 : f32 to vector<2x8xf32>
      %c0_34 = arith.constant 0 : index
      %c0_35 = arith.constant 0 : index
      %62 = vector.load %arg8[%c0_34, %c0_35] : memref<2x8xf32, #tpu.memory_space<vmem>>, vector<2x8xf32>
      tpu.vector_store %arg8[%c0_34, %c0_35], %61 {strides = array<i32>} : memref<2x8xf32, #tpu.memory_space<vmem>>, vector<2x8xf32>,
      %cst_36 = arith.constant 0.000000e+00 : f32
      %c0_37 = arith.constant 0 : index
      %63 = memref.load %arg9[%c0_37] : memref<2xf32, #tpu.memory_space<smem>>
      memref.store %cst_36, %arg9[%c0_37] : memref<2xf32, #tpu.memory_space<smem>>
      %cst_38 = arith.constant 0.000000e+00 : f32
      %c1 = arith.constant 1 : index
      %64 = memref.load %arg9[%c1] : memref<2xf32, #tpu.memory_space<smem>>
      memref.store %cst_38, %arg9[%c1] : memref<2xf32, #tpu.memory_space<smem>>
    } else {
    }
    %c0_i32_3 = arith.constant 0 : i32
    %8 = arith.cmpi eq, %arg1, %c0_i32_3 : i32
    %9 = arith.extui %8 : i1 to i32
    %c0_i32_4 = arith.constant 0 : i32
    %10 = arith.cmpi ne, %9, %c0_i32_4 : i32
    scf.if %10 {
      %cst_30 = arith.constant 0xFF800000 : f32
      %59 = vector.broadcast %cst_30 : f32 to vector<8x1xf32>
      %c0_31 = arith.constant 0 : index
      %c0_32 = arith.constant 0 : index
      %60 = vector.load %arg5[%c0_31, %c0_32] : memref<8x1xf32, #tpu.memory_space<vmem>>, vector<8x1xf32>
      tpu.vector_store %arg5[%c0_31, %c0_32], %59 {strides = array<i32>} : memref<8x1xf32, #tpu.memory_space<vmem>>, vector<8x1xf32>,
      %cst_33 = arith.constant 0.000000e+00 : f32
      %61 = vector.broadcast %cst_33 : f32 to vector<8x1xf32>
      %c0_34 = arith.constant 0 : index
      %c0_35 = arith.constant 0 : index
      %62 = vector.load %arg6[%c0_34, %c0_35] : memref<8x1xf32, #tpu.memory_space<vmem>>, vector<8x1xf32>
      tpu.vector_store %arg6[%c0_34, %c0_35], %61 {strides = array<i32>} : memref<8x1xf32, #tpu.memory_space<vmem>>, vector<8x1xf32>,
    } else {
    }
    %c0 = arith.constant 0 : index
    %c0_5 = arith.constant 0 : index
    %11 = vector.load %arg2[%c0, %c0_5] : memref<8x128xbf16, #tpu.memory_space<vmem>>, vector<8x128xbf16>
    %c0_6 = arith.constant 0 : index
    %c0_7 = arith.constant 0 : index
    %12 = vector.load %arg3[%c0_6, %c0_7] : memref<8x128xbf16, #tpu.memory_space<vmem>>, vector<8x128xbf16>
    %cst = arith.constant dense<0.000000e+00> : vector<8x8xf32>
    %13 = tpu.matmul %11, %12, %cst {dimension_numbers = #tpu.dot_dimension_numbers<[1], [1], [0], [0], [0, 0, 1, 0], [], []>} : vector<8x128xbf16>, vector<8x128xbf16>, vector<8x8xf32> -> vector<8x8xf32>
    %c0_8 = arith.constant 0 : index
    %c0_9 = arith.constant 0 : index
    %14 = vector.load %arg5[%c0_8, %c0_9] : memref<8x1xf32, #tpu.memory_space<vmem>>, vector<8x1xf32>
    %cst_10 = arith.constant dense<0xFF800000> : vector<8xf32>
    %15 = vector.multi_reduction <maximumf>, %13, %cst_10 [1] : vector<8x8xf32> to vector<8xf32>
    %16 = vector.shape_cast %15 : vector<8xf32> to vector<8x1xf32>
    %17 = arith.maximumf %14, %16 : vector<8x1xf32>
    %c0_11 = arith.constant 0 : index
    %c0_12 = arith.constant 0 : index
    %18 = vector.load %arg5[%c0_11, %c0_12] : memref<8x1xf32, #tpu.memory_space<vmem>>, vector<8x1xf32>
    %19 = arith.subf %18, %17 : vector<8x1xf32>
    %20 = math.exp %19 : vector<8x1xf32>
    %c0_13 = arith.constant 0 : index
    %c0_14 = arith.constant 0 : index
    %21 = vector.load %arg6[%c0_13, %c0_14] : memref<8x1xf32, #tpu.memory_space<vmem>>, vector<8x1xf32>
    %22 = arith.mulf %20, %21 : vector<8x1xf32>
    %23 = vector.broadcast %17 : vector<8x1xf32> to vector<8x8xf32>
    %24 = arith.subf %13, %23 : vector<8x8xf32>
    %25 = math.exp %24 : vector<8x8xf32>
    %cst_15 = arith.constant dense<0.000000e+00> : vector<8xf32>
    %26 = vector.multi_reduction <add>, %25, %cst_15 [1] : vector<8x8xf32> to vector<8xf32>
    %27 = vector.shape_cast %26 : vector<8xf32> to vector<8x1xf32>
    %28 = arith.addf %22, %27 : vector<8x1xf32>
    %c0_16 = arith.constant 0 : index
    %c0_17 = arith.constant 0 : index
    %29 = vector.load %arg6[%c0_16, %c0_17] : memref<8x1xf32, #tpu.memory_space<vmem>>, vector<8x1xf32>
    tpu.vector_store %arg6[%c0_16, %c0_17], %28 {strides = array<i32>} : memref<8x1xf32, #tpu.memory_space<vmem>>, vector<8x1xf32>,
    %c0_18 = arith.constant 0 : index
    %c0_19 = arith.constant 0 : index
    %30 = vector.load %arg5[%c0_18, %c0_19] : memref<8x1xf32, #tpu.memory_space<vmem>>, vector<8x1xf32>
    tpu.vector_store %arg5[%c0_18, %c0_19], %17 {strides = array<i32>} : memref<8x1xf32, #tpu.memory_space<vmem>>, vector<8x1xf32>,
    %31 = arith.index_cast %arg1 : i32 to index
    %c0_20 = arith.constant 0 : index
    %32 = vector.load %arg7[%31, %c0_20] : memref<2x8xf32, #tpu.memory_space<vmem>>, vector<1x8xf32>
    %cst_21 = arith.constant dense<0xFF800000> : vector<8xf32>
    %33 = vector.multi_reduction <maximumf>, %13, %cst_21 [0] : vector<8x8xf32> to vector<8xf32>
    %34 = vector.shape_cast %33 : vector<8xf32> to vector<1x8xf32>
    %35 = arith.maximumf %32, %34 : vector<1x8xf32>
    %36 = arith.subf %32, %35 : vector<1x8xf32>
    %37 = math.exp %36 : vector<1x8xf32>
    %38 = arith.index_cast %arg1 : i32 to index
    %c0_22 = arith.constant 0 : index
    %39 = vector.load %arg8[%38, %c0_22] : memref<2x8xf32, #tpu.memory_space<vmem>>, vector<1x8xf32>
    %40 = arith.mulf %37, %39 : vector<1x8xf32>
    %41 = vector.broadcast %35 : vector<1x8xf32> to vector<8x8xf32>
    %42 = arith.subf %13, %41 : vector<8x8xf32>
    %43 = math.exp %42 : vector<8x8xf32>
    %cst_23 = arith.constant dense<0.000000e+00> : vector<8xf32>
    %44 = vector.multi_reduction <add>, %43, %cst_23 [0] : vector<8x8xf32> to vector<8xf32>
    %45 = vector.shape_cast %44 : vector<8xf32> to vector<1x8xf32>
    %46 = arith.addf %40, %45 : vector<1x8xf32>
    %47 = arith.index_cast %arg1 : i32 to index
    %c0_24 = arith.constant 0 : index
    %48 = vector.load %arg8[%47, %c0_24] : memref<2x8xf32, #tpu.memory_space<vmem>>, vector<1x8xf32>
    tpu.vector_store %arg8[%47, %c0_24], %46 {strides = array<i32>} : memref<2x8xf32, #tpu.memory_space<vmem>>, vector<1x8xf32>,
    %49 = arith.index_cast %arg1 : i32 to index
    %c0_25 = arith.constant 0 : index
    %50 = vector.load %arg7[%49, %c0_25] : memref<2x8xf32, #tpu.memory_space<vmem>>, vector<1x8xf32>
    tpu.vector_store %arg7[%49, %c0_25], %35 {strides = array<i32>} : memref<2x8xf32, #tpu.memory_space<vmem>>, vector<1x8xf32>,
    %51 = arith.cmpi eq, %arg0, %arg1 : i32
    %52 = arith.extui %51 : i1 to i32
    %c0_i32_26 = arith.constant 0 : i32
    %53 = arith.cmpi ne, %52, %c0_i32_26 : i32
    scf.if %53 {
      %c1 = arith.constant 1 : index
      %59 = memref.load %arg9[%c1] : memref<2xf32, #tpu.memory_space<smem>>
      %60 = arith.extf %11 : vector<8x128xbf16> to vector<8x128xf32>
      %61 = arith.extf %12 : vector<8x128xbf16> to vector<8x128xf32>
      %62 = arith.mulf %60, %61 : vector<8x128xf32>
      %63 = vector.shape_cast %62 : vector<8x128xf32> to vector<1x8x128xf32>
      %cst_30 = arith.constant dense<0.000000e+00> : vector<1xf32>
      %64 = vector.multi_reduction <add>, %63, %cst_30 [1, 2] : vector<1x8x128xf32> to vector<1xf32>
      %65 = vector.shape_cast %64 : vector<1xf32> to vector<1x1x1xf32>
      %66 = vector.extract %65[0, 0, 0] : f32 from vector<1x1x1xf32>
      %67 = arith.addf %59, %66 : f32
      %c1_31 = arith.constant 1 : index
      %68 = memref.load %arg9[%c1_31] : memref<2xf32, #tpu.memory_space<smem>>
      memref.store %67, %arg9[%c1_31] : memref<2xf32, #tpu.memory_space<smem>>
    } else {
    }
    %c1_i32_27 = arith.constant 1 : i32
    %54 = arith.cmpi eq, %arg1, %c1_i32_27 : i32
    %55 = arith.extui %54 : i1 to i32
    %c0_i32_28 = arith.constant 0 : i32
    %56 = arith.cmpi ne, %55, %c0_i32_28 : i32
    scf.if %56 {
      %c0_30 = arith.constant 0 : index
      %59 = memref.load %arg9[%c0_30] : memref<2xf32, #tpu.memory_space<smem>>
      %c0_31 = arith.constant 0 : index
      %c0_32 = arith.constant 0 : index
      %60 = vector.load %arg5[%c0_31, %c0_32] : memref<8x1xf32, #tpu.memory_space<vmem>>, vector<8x1xf32>
      %c0_33 = arith.constant 0 : index
      %c0_34 = arith.constant 0 : index
      %61 = vector.load %arg6[%c0_33, %c0_34] : memref<8x1xf32, #tpu.memory_space<vmem>>, vector<8x1xf32>
      %62 = math.log %61 : vector<8x1xf32>
      %63 = arith.addf %60, %62 : vector<8x1xf32>
      %64 = vector.shape_cast %63 : vector<8x1xf32> to vector<1x8x1xf32>
      %cst_35 = arith.constant dense<0.000000e+00> : vector<1xf32>
      %65 = vector.multi_reduction <add>, %64, %cst_35 [1, 2] : vector<1x8x1xf32> to vector<1xf32>
      %66 = vector.shape_cast %65 : vector<1xf32> to vector<1x1x1xf32>
      %67 = vector.extract %66[0, 0, 0] : f32 from vector<1x1x1xf32>
      %68 = arith.addf %59, %67 : f32
      %c0_36 = arith.constant 0 : index
      %69 = memref.load %arg9[%c0_36] : memref<2xf32, #tpu.memory_space<smem>>
      memref.store %68, %arg9[%c0_36] : memref<2xf32, #tpu.memory_space<smem>>
    } else {
    }
    %57 = arith.extui %2 : i1 to i32
    %c0_i32_29 = arith.constant 0 : i32
    %58 = arith.cmpi ne, %57, %c0_i32_29 : i32
    scf.if %58 {
      %c0_30 = arith.constant 0 : index
      %c0_31 = arith.constant 0 : index
      %59 = vector.load %arg7[%c0_30, %c0_31] : memref<2x8xf32, #tpu.memory_space<vmem>>, vector<2x8xf32>
      %c0_32 = arith.constant 0 : index
      %c0_33 = arith.constant 0 : index
      %60 = vector.load %arg8[%c0_32, %c0_33] : memref<2x8xf32, #tpu.memory_space<vmem>>, vector<2x8xf32>
      %61 = math.log %60 : vector<2x8xf32>
      %62 = arith.addf %59, %61 : vector<2x8xf32>
      %63 = vector.shape_cast %62 : vector<2x8xf32> to vector<1x2x8xf32>
      %cst_34 = arith.constant dense<0.000000e+00> : vector<1xf32>
      %64 = vector.multi_reduction <add>, %63, %cst_34 [1, 2] : vector<1x2x8xf32> to vector<1xf32>
      %65 = vector.shape_cast %64 : vector<1xf32> to vector<1x1x1xf32>
      %66 = vector.extract %65[0, 0, 0] : f32 from vector<1x1x1xf32>
      %cst_35 = arith.constant 1.000000e+00 : f32
      %cst_36 = arith.constant 1.600000e+01 : f32
      %67 = arith.divf %cst_35, %cst_36 : f32
      %c0_37 = arith.constant 0 : index
      %68 = memref.load %arg9[%c0_37] : memref<2xf32, #tpu.memory_space<smem>>
      %69 = arith.addf %68, %66 : f32
      %cst_38 = arith.constant 5.000000e-01 : f32
      %70 = arith.mulf %cst_38, %69 : f32
      %c1 = arith.constant 1 : index
      %71 = memref.load %arg9[%c1] : memref<2xf32, #tpu.memory_space<smem>>
      %72 = arith.subf %70, %71 : f32
      %73 = arith.mulf %72, %67 : f32
      %c0_39 = arith.constant 0 : index
      %c0_40 = arith.constant 0 : index
      %74 = memref.load %arg4[%c0_39, %c0_40] : memref<1x1xf32, #tpu.memory_space<smem>>
      memref.store %73, %arg4[%c0_39, %c0_40] : memref<1x1xf32, #tpu.memory_space<smem>>
    } else {
    }
    return
  }
  func.func @transform_0(%arg0: i32, %arg1: i32) -> (i32, i32) {
    %c0_i32 = arith.constant 0 : i32
    %c0_i32_0 = arith.constant 0 : i32
    return %arg0, %c0_i32 : i32, i32
  }
  func.func @transform_1(%arg0: i32, %arg1: i32) -> (i32, i32) {
    %c0_i32 = arith.constant 0 : i32
    %c0_i32_0 = arith.constant 0 : i32
    return %arg1, %c0_i32 : i32, i32
  }
  func.func @transform_2(%arg0: i32, %arg1: i32) -> (i32, i32) {
    %c0_i32 = arith.constant 0 : i32
    %c0_i32_0 = arith.constant 0 : i32
    %c0_i32_1 = arith.constant 0 : i32
    return %c0_i32, %c0_i32_0 : i32, i32
  }
}

</mosaic_0001>

<llo_original>
// kernel: multi_label_contrastive_forward.5
$region0: #{multi_label_contrastive_forward.5}
  #allocation0 [shape = 'u32[]', space=smem, size = 0x4, offset = 0x4, fixed_abs, tag = 'smem constant byte address 0x4 - core index']
  #allocation1 [shape = 'u32[72,128]{1,0:T(1,128)}', space=vmem, size = 0x9000, scoped, tag = 'internal scratch']
  %s0 = inlined_call_operand.vmem [shape: bf16[16,32], index: 0, kind: input, shape index: {}]
  %s1 = inlined_call_operand.vmem [shape: bf16[32,256], index: 1, kind: input, shape index: {}]
  %s2 = inlined_call_operand.vmem [shape: bf16[16,256], index: 2, kind: output, shape index: {0}]
  %s3 = inlined_call_operand.vmem [shape: f32[2,1,256], index: 3, kind: output, shape index: {1}]
  %s4 = inlined_call_operand.vmem [shape: f32[2,1,256], index: 4, kind: output, shape index: {2}]
  %5 = xla_tuple %s2, %s3, %s4
  %s6 = sld [smem:[#allocation0]]
  $region98: #{multi_label_contrastive_forward.5} parent=0
    _
  %s8 = ssub.s32 1, %s6
  %s9 = scalar_select 0, %s8, %s6
  $region1: #{multi_label_contrastive_forward.5} parent=0
    #allocation2 [shape = 'u8[16384]{0}', space=vmem, size = 0x4000, scoped, tag = 'input window, operand 1']
    loop: start=0, step=1, limit=6
    $region2: #{multi_label_contrastive_forward.5} parent=1 // loop_pre_header
      _
    $region3: #{multi_label_contrastive_forward.5} parent=1 // loop_header
      %s11 = sphi 0, %s15
      %p12 = scmp.ge.s32.totalorder %s11, 6
      %s18 = sphi 0, %s30
      %s19 = sphi 0, %s26
      %s20 = sphi 0, %s18
      %s21 = sphi 0, %s19
      %s22 = sphi 0, %s20
      %s23 = sphi 0, %s21
      %s33 = sphi 0, %s35
      %s36 = sphi 0, %s33
      %s37 = sphi 0, %s36
      %s53 = sphi 0, %s37
      %s59 = sphi 0, %s61
      %s62 = sphi 0, %s59
      %s63 = sphi 0, %s62
      %s79 = sphi 0, %s63
      %s87 = sphi 0, %s89
      %s90 = sphi 0, %s87
      %s91 = sphi 0, %s90
      %s107 = sphi 0, %s91
      %s115 = sphi 0, %s117
      %s118 = sphi 0, %s115
      %s119 = sphi 0, %s118
      %s135 = sphi 0, %s119
      %s143 = sphi 0, %s145
      %s146 = sphi 0, %s143
      %s147 = sphi 0, %s146
      %s163 = sphi 0, %s147
    $region4: #{multi_label_contrastive_forward.5} parent=1 // loop_header_branch
      %14 = sbr.rel (%p12) target = $region8
    $region5: #{multi_label_contrastive_forward.5} parent=1 // loop_body
      %s16 = ssub.s32 %s11, 1
      %s17 = ssub.s32 %s11, 2
      %s24 = sadd.s32 1, %s19
      %p25 = scmp.ge.s32.totalorder %s24, 2
      %s26 = scalar_select %p25, 0, %s24
      %s27 = sadd.s32 1, %s18
      %s28 = scalar_select %p25, %s27, %s18
      %p29 = scmp.ge.s32.totalorder %s28, 2
      %s30 = scalar_select %p29, 0, %s28
      %s31 = ssub.s32 %s18, %s30
      %p32 = scmp.eq.s32.totalorder %s31, 0
      %s34 = sadd.s32 %s33, 1
      %s35 = scalar_select %p32, %s33, %s34
      %p38 = pneg %p32
      %p39 = scmp.eq.s32.totalorder %s11, 3
      %p40 = por %p38, %p39
      %p41 = scmp.ne.s32.totalorder %s33, %s36
      %p42 = scmp.eq.s32.totalorder %s11, 0
      %p43 = por %p41, %p42
      %p44 = scmp.ne.s32.totalorder %s33, %s36
      %p45 = scmp.eq.s32.totalorder %s16, 3
      %p46 = por %p44, %p45
      %p47 = scmp.ne.s32.totalorder %s36, %s37
      %p48 = scmp.eq.s32.totalorder %s16, 0
      %p49 = por %p47, %p48
      %p50 = scmp.ne.s32.totalorder %s36, %s37
      %p51 = scmp.eq.s32.totalorder %s17, 3
      %p52 = por %p50, %p51
      %p54 = scmp.ne.s32.totalorder %s37, %s53
      %p55 = scmp.eq.s32.totalorder %s17, 0
      %p56 = por %p54, %p55
      %s57 = ssub.s32 %s19, %s26
      %p58 = scmp.eq.s32.totalorder %s57, 0
      %s60 = sadd.s32 %s59, 1
      %s61 = scalar_select %p58, %s59, %s60
      %p64 = pneg %p58
      %p65 = scmp.eq.s32.totalorder %s11, 3
      %p66 = por %p64, %p65
      %p67 = scmp.ne.s32.totalorder %s59, %s62
      %p68 = scmp.eq.s32.totalorder %s11, 0
      %p69 = por %p67, %p68
      %p70 = scmp.ne.s32.totalorder %s59, %s62
      %p71 = scmp.eq.s32.totalorder %s16, 3
      %p72 = por %p70, %p71
      %p73 = scmp.ne.s32.totalorder %s62, %s63
      %p74 = scmp.eq.s32.totalorder %s16, 0
      %p75 = por %p73, %p74
      %p76 = scmp.ne.s32.totalorder %s62, %s63
      %p77 = scmp.eq.s32.totalorder %s17, 3
      %p78 = por %p76, %p77
      %p80 = scmp.ne.s32.totalorder %s63, %s79
      %p81 = scmp.eq.s32.totalorder %s17, 0
      %p82 = por %p80, %p81
      %s83 = ssub.s32 %s18, %s30
      %s84 = ssub.s32 %s19, %s26
      %s85 = sor.u32 %s83, %s84
      %p86 = scmp.eq.s32.totalorder %s85, 0
      %s88 = sadd.s32 %s87, 1
      %s89 = scalar_select %p86, %s87, %s88
      %p92 = pneg %p86
      %p93 = scmp.eq.s32.totalorder %s11, 3
      %p94 = por %p92, %p93
      %p95 = scmp.ne.s32.totalorder %s87, %s90
      %p96 = scmp.eq.s32.totalorder %s11, 0
      %p97 = por %p95, %p96
      %p98 = scmp.ne.s32.totalorder %s87, %s90
      %p99 = scmp.eq.s32.totalorder %s16, 3
      %p100 = por %p98, %p99
      %p101 = scmp.ne.s32.totalorder %s90, %s91
      %p102 = scmp.eq.s32.totalorder %s16, 0
      %p103 = por %p101, %p102
      %p104 = scmp.ne.s32.totalorder %s90, %s91
      %p105 = scmp.eq.s32.totalorder %s17, 3
      %p106 = por %p104, %p105
      %p108 = scmp.ne.s32.totalorder %s91, %s107
      %p109 = scmp.eq.s32.totalorder %s17, 0
      %p110 = por %p108, %p109
      %s111 = ssub.s32 %s18, %s30
      %s112 = ssub.s32 %s19, %s26
      %s113 = sor.u32 %s111, %s112
      %p114 = scmp.eq.s32.totalorder %s113, 0
      %s116 = sadd.s32 %s115, 1
      %s117 = scalar_select %p114, %s115, %s116
      %p120 = pneg %p114
      %p121 = scmp.eq.s32.totalorder %s11, 3
      %p122 = por %p120, %p121
      %p123 = scmp.ne.s32.totalorder %s115, %s118
      %p124 = scmp.eq.s32.totalorder %s11, 0
      %p125 = por %p123, %p124
      %p126 = scmp.ne.s32.totalorder %s115, %s118
      %p127 = scmp.eq.s32.totalorder %s16, 3
      %p128 = por %p126, %p127
      %p129 = scmp.ne.s32.totalorder %s118, %s119
      %p130 = scmp.eq.s32.totalorder %s16, 0
      %p131 = por %p129, %p130
      %p132 = scmp.ne.s32.totalorder %s118, %s119
      %p133 = scmp.eq.s32.totalorder %s17, 3
      %p134 = por %p132, %p133
      %p136 = scmp.ne.s32.totalorder %s119, %s135
      %p137 = scmp.eq.s32.totalorder %s17, 0
      %p138 = por %p136, %p137
      %s139 = ssub.s32 %s18, %s30
      %s140 = ssub.s32 %s19, %s26
      %s141 = sor.u32 %s139, %s140
      %p142 = scmp.eq.s32.totalorder %s141, 0
      %s144 = sadd.s32 %s143, 1
      %s145 = scalar_select %p142, %s143, %s144
      %p148 = pneg %p142
      %p149 = scmp.eq.s32.totalorder %s11, 3
      %p150 = por %p148, %p149
      %p151 = scmp.ne.s32.totalorder %s143, %s146
      %p152 = scmp.eq.s32.totalorder %s11, 0
      %p153 = por %p151, %p152
      %p154 = scmp.ne.s32.totalorder %s143, %s146
      %p155 = scmp.eq.s32.totalorder %s16, 3
      %p156 = por %p154, %p155
      %p157 = scmp.ne.s32.totalorder %s146, %s147
      %p158 = scmp.eq.s32.totalorder %s16, 0
      %p159 = por %p157, %p158
      %p160 = scmp.ne.s32.totalorder %s146, %s147
      %p161 = scmp.eq.s32.totalorder %s17, 3
      %p162 = por %p160, %p161
      %p164 = scmp.ne.s32.totalorder %s147, %s163
      %p165 = scmp.eq.s32.totalorder %s17, 0
      %p166 = por %p164, %p165
      %p167 = scmp.le.s32.totalorder 1, %s11
      %p168 = scmp.lt.s32.totalorder %s11, 5
      %p169 = pnand %p167, %p168
      %p170 = pneg %p169
      // Predicated region
      $region9: #{multi_label_contrastive_forward.5} parent=5 // pred_check
        _
      $region10: #{multi_label_contrastive_forward.5} parent=5 // pred_check_branch
        %172 = sbr.rel (%p169) target = $region12
      $region11: #{multi_label_contrastive_forward.5} parent=5 // pred_region
        %s173 = ssub.s32 %s11, 1
      $region12: #{multi_label_contrastive_forward.5} parent=5 // pred_fallthru
        _
      %p174 = scmp.lt.s32.totalorder %s11, 4
      // Predicated region
      $region13: #{multi_label_contrastive_forward.5} parent=5 // pred_check
        %p175 = pneg %p174
      $region14: #{multi_label_contrastive_forward.5} parent=5 // pred_check_branch
        %177 = sbr.rel (%p175) target = $region16
      $region15: #{multi_label_contrastive_forward.5} parent=5 // pred_region
        // Predicated region
        $region17: #{multi_label_contrastive_forward.5} parent=15 // pred_check
          %p178 = pneg %p43
        $region18: #{multi_label_contrastive_forward.5} parent=15 // pred_check_branch
          %180 = sbr.rel (%p178) target = $region20
        $region19: #{multi_label_contrastive_forward.5} parent=15 // pred_region
          %p181 = scmp.lt.s32.totalorder %s18, 1
          %s182 = scalar_select %p181, %s18, 1
          %s183 = smul.addr %s182, 4
          %s184 = scalar_lea.vmem %s0, %s183
        $region20: #{multi_label_contrastive_forward.5} parent=15 // pred_fallthru
          _
        // Predicated region
        $region21: #{multi_label_contrastive_forward.5} parent=15 // pred_check
          %p185 = pneg %p69
        $region22: #{multi_label_contrastive_forward.5} parent=15 // pred_check_branch
          %187 = sbr.rel (%p185) target = $region24
        $region23: #{multi_label_contrastive_forward.5} parent=15 // pred_region
          %s188 = sand.u32 %s59, 1
          %s189 = sand.u32 %s59, 1
          %s190 = smul.addr %s189, 16
          %s191 = scalar_lea.vmem [#allocation2], %s190
          %s192 = smul.addr %s19, 4
          %s193 = scalar_lea.vmem %s1, %s192
          // Predicated region
          $region25: #{multi_label_contrastive_forward.5} parent=23 // pred_check
            _
          $region26: #{multi_label_contrastive_forward.5} parent=23 // pred_check_branch
            %195 = sbr.rel (0) target = $region28
          $region27: #{multi_label_contrastive_forward.5} parent=23 // pred_region
            // Predicated region
            $region29: #{multi_label_contrastive_forward.5} parent=27 // pred_check
              _
            $region30: #{multi_label_contrastive_forward.5} parent=27 // pred_check_branch
              %197 = sbr.rel target = $region32
            $region31: #{multi_label_contrastive_forward.5} parent=27 // pred_region
              // Predicated region
              $region44: #{multi_label_contrastive_forward.5} parent=31 // pred_check
                _
              $region45: #{multi_label_contrastive_forward.5} parent=31 // pred_check_branch
                %219 = sbr.rel (0) target = $region47
              $region46: #{multi_label_contrastive_forward.5} parent=31 // pred_region
                loop: start=0, step=1, limit=1
                $region48: #{multi_label_contrastive_forward.5} parent=46 // loop_pre_header
                  _
                $region49: #{multi_label_contrastive_forward.5} parent=46 // loop_header
                  %s221 = sphi 0, %s225
                  %p222 = scmp.ge.s32.totalorder %s221, 1
                  %s226 = sphi %s193, %s193
                  %s227 = sphi %s191, %s191
                $region50: #{multi_label_contrastive_forward.5} parent=46 // loop_header_branch
                  %224 = sbr.rel (%p222) target = $region54
                $region51: #{multi_label_contrastive_forward.5} parent=46 // loop_body
                  _
                $region52: #{multi_label_contrastive_forward.5} parent=46 // loop_footer
                  %s225 = sadd.s32 1, %s221
                $region53: #{multi_label_contrastive_forward.5} parent=46 // loop_footer_branch
                  %220 = sbr.rel target = $region49
                $region54: #{multi_label_contrastive_forward.5} parent=46 // loop_exit
                  _
                %s229 = ssub.s32 16, 1
                loop: start=0, step=1, limit=1
                $region55: #{multi_label_contrastive_forward.5} parent=46 // loop_pre_header
                  _
                $region56: #{multi_label_contrastive_forward.5} parent=46 // loop_header
                  %s231 = sphi 0, %s235
                  %p232 = scmp.ge.s32.totalorder %s231, 1
                  %s236 = sphi %s193, %s193
                  %s237 = sphi %s191, %s191
                $region57: #{multi_label_contrastive_forward.5} parent=46 // loop_header_branch
                  %234 = sbr.rel (%p232) target = $region61
                $region58: #{multi_label_contrastive_forward.5} parent=46 // loop_body
                  %v238 = vld [vmem:[%s236] sm:%s229]
                  %239 = vst [vmem:[%s237] sm:%s229] %v238
                  %v240 = vld [vmem:[%s236 + $0x8] sm:%s229]
                  %241 = vst [vmem:[%s237 + $0x4] sm:%s229] %v240
                  %v242 = vld [vmem:[%s236 + $0x10] sm:%s229]
                  %243 = vst [vmem:[%s237 + $0x8] sm:%s229] %v242
                  %v244 = vld [vmem:[%s236 + $0x18] sm:%s229]
                  %245 = vst [vmem:[%s237 + $0xc] sm:%s229] %v244
                $region59: #{multi_label_contrastive_forward.5} parent=46 // loop_footer
                  %s235 = sadd.s32 1, %s231
                $region60: #{multi_label_contrastive_forward.5} parent=46 // loop_footer_branch
                  %230 = sbr.rel target = $region56
                $region61: #{multi_label_contrastive_forward.5} parent=46 // loop_exit
                  _
              $region47: #{multi_label_contrastive_forward.5} parent=31 // pred_fallthru
                _
            $region32: #{multi_label_contrastive_forward.5} parent=27 // pred_fallthru
              _
            // Predicated region
            $region33: #{multi_label_contrastive_forward.5} parent=27 // pred_check
              _
            $region34: #{multi_label_contrastive_forward.5} parent=27 // pred_check_branch
              %199 = sbr.rel (0) target = $region36
            $region35: #{multi_label_contrastive_forward.5} parent=27 // pred_region
              %s201 = ssub.s32 16, 1
              loop: start=0, step=1, limit=1
              $region37: #{multi_label_contrastive_forward.5} parent=35 // loop_pre_header
                _
              $region38: #{multi_label_contrastive_forward.5} parent=35 // loop_header
                %s203 = sphi 0, %s207
                %p204 = scmp.ge.s32.totalorder %s203, 1
                %s208 = sphi %s193, %s193
                %s209 = sphi %s191, %s191
              $region39: #{multi_label_contrastive_forward.5} parent=35 // loop_header_branch
                %206 = sbr.rel (%p204) target = $region43
              $region40: #{multi_label_contrastive_forward.5} parent=35 // loop_body
                %v210 = vld [vmem:[%s208] sm:%s201]
                %211 = vst [vmem:[%s209] sm:%s201] %v210
                %v212 = vld [vmem:[%s208 + $0x8] sm:%s201]
                %213 = vst [vmem:[%s209 + $0x4] sm:%s201] %v212
                %v214 = vld [vmem:[%s208 + $0x10] sm:%s201]
                %215 = vst [vmem:[%s209 + $0x8] sm:%s201] %v214
                %v216 = vld [vmem:[%s208 + $0x18] sm:%s201]
                %217 = vst [vmem:[%s209 + $0xc] sm:%s201] %v216
              $region41: #{multi_label_contrastive_forward.5} parent=35 // loop_footer
                %s207 = sadd.s32 1, %s203
              $region42: #{multi_label_contrastive_forward.5} parent=35 // loop_footer_branch
                %202 = sbr.rel target = $region38
              $region43: #{multi_label_contrastive_forward.5} parent=35 // loop_exit
                _
            $region36: #{multi_label_contrastive_forward.5} parent=27 // pred_fallthru
              _
          $region28: #{multi_label_contrastive_forward.5} parent=23 // pred_fallthru
            _
          %246 = vnop
        $region24: #{multi_label_contrastive_forward.5} parent=15 // pred_fallthru
          _
      $region16: #{multi_label_contrastive_forward.5} parent=5 // pred_fallthru
        _
      %p247 = scmp.le.s32.totalorder 1, %s11
      %p248 = scmp.lt.s32.totalorder %s11, 5
      %p249 = pnand %p247, %p248
      %p250 = pneg %p249
      // Predicated region
      $region62: #{multi_label_contrastive_forward.5} parent=5 // pred_check
        _
      $region63: #{multi_label_contrastive_forward.5} parent=5 // pred_check_branch
        %252 = sbr.rel (%p249) target = $region65
      $region64: #{multi_label_contrastive_forward.5} parent=5 // pred_region
        %s253 = ssub.s32 %s11, 1
        %s254 = sand.u32 %s62, 1
        %s255 = sand.u32 %s62, 1
        %s256 = smul.addr %s255, 16
        %s257 = scalar_lea.vmem [#allocation2], %s256
        // Predicated region
        $region66: #{multi_label_contrastive_forward.5} parent=64 // pred_check
          %p258 = pneg %p75
        $region67: #{multi_label_contrastive_forward.5} parent=64 // pred_check_branch
          %260 = sbr.rel (%p258) target = $region69
        $region68: #{multi_label_contrastive_forward.5} parent=64 // pred_region
          _
        $region69: #{multi_label_contrastive_forward.5} parent=64 // pred_fallthru
          _
        %p261 = scmp.lt.s32.totalorder %s20, 1
        %s262 = scalar_select %p261, %s20, 1
        %s263 = smul.addr %s262, 4
        %s264 = scalar_lea.vmem %s0, %s263
        %p265 = pneg %p49
        %p266 = pneg %p46
        %s267 = sand.u32 %s62, 1
        %s268 = sand.u32 %s62, 1
        %s269 = smul.addr %s268, 16
        %s270 = scalar_lea.vmem [#allocation2], %s269
        %p271 = pneg %p75
        %p272 = pneg %p72
        %p273 = pneg %p103
        %p274 = pneg %p100
        %p275 = scmp.lt.s32.totalorder %s20, 1
        %s276 = scalar_select %p275, %s20, 1
        %p277 = scmp.lt.s32.totalorder %s21, 1
        %s278 = scalar_select %p277, %s21, 1
        %s279 = smul.addr %s276, 2
        %s280 = sadd.s32 %s278, %s279
        %s281 = smul.addr %s280, 4
        %s282 = scalar_lea.vmem %s2, %s281
        %p283 = pneg %p131
        %p284 = pneg %p128
        %p285 = scmp.lt.s32.totalorder %s20, 1
        %s286 = scalar_select %p285, %s20, 1
        %p287 = scmp.lt.s32.totalorder %s21, 1
        %s288 = scalar_select %p287, %s21, 1
        %s289 = smul.addr %s286, 2
        %s290 = sadd.s32 %s288, %s289
        %s291 = scalar_lea.vmem %s3, %s290
        %p292 = pneg %p159
        %p293 = pneg %p156
        %p294 = scmp.lt.s32.totalorder %s20, 1
        %s295 = scalar_select %p294, %s20, 1
        %p296 = scmp.lt.s32.totalorder %s21, 1
        %s297 = scalar_select %p296, %s21, 1
        %s298 = smul.addr %s295, 2
        %s299 = sadd.s32 %s297, %s298
        %s300 = scalar_lea.vmem %s4, %s299
        %p301 = scmp.lt.s32.totalorder %s20, 1
        %s302 = scalar_select %p301, %s20, 1
        %s303 = smul.addr %s302, 4
        %s304 = scalar_lea.vmem %s0, %s303
        %p305 = scmp.lt.s32.totalorder %s20, 1
        %s306 = scalar_select %p305, %s20, 1
        %p307 = scmp.lt.s32.totalorder %s21, 1
        %s308 = scalar_select %p307, %s21, 1
        %s309 = smul.addr %s306, 2
        %s310 = sadd.s32 %s308, %s309
        %s311 = smul.addr %s310, 4
        %s312 = scalar_lea.vmem %s2, %s311
        %p313 = scmp.lt.s32.totalorder %s20, 1
        %s314 = scalar_select %p313, %s20, 1
        %p315 = scmp.lt.s32.totalorder %s21, 1
        %s316 = scalar_select %p315, %s21, 1
        %s317 = smul.addr %s314, 2
        %s318 = sadd.s32 %s316, %s317
        %s319 = scalar_lea.vmem %s3, %s318
        %p320 = scmp.lt.s32.totalorder %s20, 1
        %s321 = scalar_select %p320, %s20, 1
        %p322 = scmp.lt.s32.totalorder %s21, 1
        %s323 = scalar_select %p322, %s21, 1
        %s324 = smul.addr %s321, 2
        %s325 = sadd.s32 %s323, %s324
        %s326 = scalar_lea.vmem %s4, %s325
        %v328 = vld [vmem:[%s304] sm:$0xf]
        %v329 = vld [vmem:[%s257] sm:$0xf]
        %v330 = vld [vmem:[%s257 + $0x4] sm:$0xf]
        %v331 = vld [vmem:[%s257 + $0x8] sm:$0xf]
        %v332 = vld [vmem:[%s257 + $0xc] sm:$0xf]
        %v337 = vunpack.c.l.b16 %v329
        %v338 = vunpack.c.l.b16 %v330
        %v339 = vunpack.c.l.b16 %v331
        %v340 = vunpack.c.l.b16 %v332
        %v341 = vpack.c.b16 %v338, %v337
        %v342 = vpack.c.b16 %v340, %v339
        %vm345 = vcmask 261120
        %v347 = vsel %vm345, %v328, 0
        %349 = vmatpush.bf16.msra.mxu0 0
        %350 = vmatpush.bf16.msra.mxu0 0
        %351 = vmatpush.bf16.msra.mxu0 0
        %352 = vmatpush.bf16.msra.mxu0 0
        %353 = vmatpush.bf16.msra.mxu0 0
        %354 = vmatpush.bf16.msra.mxu0 0
        %355 = vmatpush.bf16.msra.mxu0 %v342
        %356 = vmatpush.bf16.msra.mxu0 %v341
        %357 = vmatmul.bf16.gmra.mxu0 %v347
        %v358 = vpop.f32.mrf.mxu0
        %v359 = vadd.f32 0.0, %v358
        %v360 = vpop.f32.mrf.mxu0
        %361 = vdwg.mxu0
        %v362 = vpack.c.bf16 %v359, %v359
        %363 = vst [vmem:[%s312] sm:$0xf] %v362
        %v364 = vrot.slane %v359, 4
        %v365 = vadd.f32 %v359, %v364
        %v366 = vrot.slane %v365, 2
        %v367 = vadd.f32 %v365, %v366
        %v368 = vrot.slane %v367, 1
        %v369 = vadd.f32 %v367, %v368
        %370 = vst [vmem:[%s319] sm:$0x1] %v369
        %v371 = vmul.f32 %v359, %v359
        %v372 = vrot.slane %v371, 4
        %v373 = vadd.f32 %v371, %v372
        %v374 = vrot.slane %v373, 2
        %v375 = vadd.f32 %v373, %v374
        %v376 = vrot.slane %v375, 1
        %v377 = vadd.f32 %v375, %v376
        %378 = vst [vmem:[%s326] sm:$0x1] %v377
        %p379 = scmp.lt.s32.totalorder %s20, 1
        %s380 = scalar_select %p379, %s20, 1
        %p381 = scmp.lt.s32.totalorder %s21, 1
        %s382 = scalar_select %p381, %s21, 1
        %s383 = smul.addr %s380, 2
        %s384 = sadd.s32 %s382, %s383
        %s385 = smul.addr %s384, 4
        %s386 = scalar_lea.vmem %s2, %s385
        %p387 = scmp.lt.s32.totalorder %s20, 1
        %s388 = scalar_select %p387, %s20, 1
        %p389 = scmp.lt.s32.totalorder %s21, 1
        %s390 = scalar_select %p389, %s21, 1
        %s391 = smul.addr %s388, 2
        %s392 = sadd.s32 %s390, %s391
        %s393 = scalar_lea.vmem %s3, %s392
        %p394 = scmp.lt.s32.totalorder %s20, 1
        %s395 = scalar_select %p394, %s20, 1
        %p396 = scmp.lt.s32.totalorder %s21, 1
        %s397 = scalar_select %p396, %s21, 1
        %s398 = smul.addr %s395, 2
        %s399 = sadd.s32 %s397, %s398
        %s400 = scalar_lea.vmem %s4, %s399
        // Predicated region
        $region70: #{multi_label_contrastive_forward.5} parent=64 // pred_check
          %p401 = pneg %p100
        $region71: #{multi_label_contrastive_forward.5} parent=64 // pred_check_branch
          %403 = sbr.rel (%p401) target = $region73
        $region72: #{multi_label_contrastive_forward.5} parent=64 // pred_region
          _
        $region73: #{multi_label_contrastive_forward.5} parent=64 // pred_fallthru
          _
        // Predicated region
        $region74: #{multi_label_contrastive_forward.5} parent=64 // pred_check
          %p404 = pneg %p128
        $region75: #{multi_label_contrastive_forward.5} parent=64 // pred_check_branch
          %406 = sbr.rel (%p404) target = $region77
        $region76: #{multi_label_contrastive_forward.5} parent=64 // pred_region
          _
        $region77: #{multi_label_contrastive_forward.5} parent=64 // pred_fallthru
          _
        // Predicated region
        $region78: #{multi_label_contrastive_forward.5} parent=64 // pred_check
          %p407 = pneg %p156
        $region79: #{multi_label_contrastive_forward.5} parent=64 // pred_check_branch
          %409 = sbr.rel (%p407) target = $region81
        $region80: #{multi_label_contrastive_forward.5} parent=64 // pred_region
          _
        $region81: #{multi_label_contrastive_forward.5} parent=64 // pred_fallthru
          _
      $region65: #{multi_label_contrastive_forward.5} parent=5 // pred_fallthru
        _
      %p410 = scmp.le.s32.totalorder 2, %s11
      // Predicated region
      $region82: #{multi_label_contrastive_forward.5} parent=5 // pred_check
        %p411 = pneg %p410
      $region83: #{multi_label_contrastive_forward.5} parent=5 // pred_check_branch
        %413 = sbr.rel (%p411) target = $region85
      $region84: #{multi_label_contrastive_forward.5} parent=5 // pred_region
        %s414 = ssub.s32 %s11, 2
        // Predicated region
        $region86: #{multi_label_contrastive_forward.5} parent=84 // pred_check
          %p415 = pneg %p106
        $region87: #{multi_label_contrastive_forward.5} parent=84 // pred_check_branch
          %417 = sbr.rel (%p415) target = $region89
        $region88: #{multi_label_contrastive_forward.5} parent=84 // pred_region
          %p418 = scmp.lt.s32.totalorder %s22, 1
          %s419 = scalar_select %p418, %s22, 1
          %p420 = scmp.lt.s32.totalorder %s23, 1
          %s421 = scalar_select %p420, %s23, 1
          %s422 = smul.addr %s419, 2
          %s423 = sadd.s32 %s421, %s422
          %s424 = smul.addr %s423, 4
          %s425 = scalar_lea.vmem %s2, %s424
        $region89: #{multi_label_contrastive_forward.5} parent=84 // pred_fallthru
          _
        // Predicated region
        $region90: #{multi_label_contrastive_forward.5} parent=84 // pred_check
          %p426 = pneg %p134
        $region91: #{multi_label_contrastive_forward.5} parent=84 // pred_check_branch
          %428 = sbr.rel (%p426) target = $region93
        $region92: #{multi_label_contrastive_forward.5} parent=84 // pred_region
          %p429 = scmp.lt.s32.totalorder %s22, 1
          %s430 = scalar_select %p429, %s22, 1
          %p431 = scmp.lt.s32.totalorder %s23, 1
          %s432 = scalar_select %p431, %s23, 1
          %s433 = smul.addr %s430, 2
          %s434 = sadd.s32 %s432, %s433
          %s435 = scalar_lea.vmem %s3, %s434
        $region93: #{multi_label_contrastive_forward.5} parent=84 // pred_fallthru
          _
        // Predicated region
        $region94: #{multi_label_contrastive_forward.5} parent=84 // pred_check
          %p436 = pneg %p162
        $region95: #{multi_label_contrastive_forward.5} parent=84 // pred_check_branch
          %438 = sbr.rel (%p436) target = $region97
        $region96: #{multi_label_contrastive_forward.5} parent=84 // pred_region
          %p439 = scmp.lt.s32.totalorder %s22, 1
          %s440 = scalar_select %p439, %s22, 1
          %p441 = scmp.lt.s32.totalorder %s23, 1
          %s442 = scalar_select %p441, %s23, 1
          %s443 = smul.addr %s440, 2
          %s444 = sadd.s32 %s442, %s443
          %s445 = scalar_lea.vmem %s4, %s444
        $region97: #{multi_label_contrastive_forward.5} parent=84 // pred_fallthru
          _
      $region85: #{multi_label_contrastive_forward.5} parent=5 // pred_fallthru
        _
    $region6: #{multi_label_contrastive_forward.5} parent=1 // loop_footer
      %s15 = sadd.s32 1, %s11
    $region7: #{multi_label_contrastive_forward.5} parent=1 // loop_footer_branch
      %10 = sbr.rel target = $region3
    $region8: #{multi_label_contrastive_forward.5} parent=1 // loop_exit
      _

// kernel: multi_label_contrastive_forward.7
$region0: #{multi_label_contrastive_forward.7}
  #allocation0 [shape = 'u32[]', space=smem, size = 0x4, offset = 0x4, fixed_abs, tag = 'smem constant byte address 0x4 - core index']
  #allocation1 [shape = 'u32[72,128]{1,0:T(1,128)}', space=vmem, size = 0x9000, scoped, tag = 'internal scratch']
  %s0 = inlined_call_operand.vmem [shape: bf16[16,48], index: 0, kind: input, shape index: {}]
  %s1 = inlined_call_operand.hbm [shape: bf16[48,256], index: 1, kind: input, shape index: {}]
  %s2 = inlined_call_operand.vmem [shape: bf16[16,256], index: 2, kind: output, shape index: {0}]
  %s3 = inlined_call_operand.vmem [shape: f32[2,1,256], index: 3, kind: output, shape index: {1}]
  %s4 = inlined_call_operand.vmem [shape: f32[2,1,256], index: 4, kind: output, shape index: {2}]
  %5 = xla_tuple %s2, %s3, %s4
  %s6 = sld [smem:[#allocation0]]
  $region61: #{multi_label_contrastive_forward.7} parent=0
    _
  %s8 = ssub.s32 1, %s6
  %s9 = scalar_select 0, %s8, %s6
  $region1: #{multi_label_contrastive_forward.7} parent=0
    #allocation2 [shape = 'u8[24576]{0}', space=vmem, size = 0x6000, scoped, tag = 'input window, operand 1']
    #allocation3 [shape = 's32[2]{0}', space=sflag, size = 0x8, scoped, tag = 'scoped memory for multi_label_contrastive_forward.7']
    %10 = vsyncpa [#allocation3], 0
    %s11 = scalar_lea.sflag [#allocation3], 1
    %12 = vsyncpa %s11, 0
    loop: start=0, step=1, limit=6
    $region2: #{multi_label_contrastive_forward.7} parent=1 // loop_pre_header
      _
    $region3: #{multi_label_contrastive_forward.7} parent=1 // loop_header
      %s14 = sphi 0, %s18
      %p15 = scmp.ge.s32.totalorder %s14, 6
      %s21 = sphi 0, %s33
      %s22 = sphi 0, %s29
      %s23 = sphi 0, %s21
      %s24 = sphi 0, %s22
      %s25 = sphi 0, %s23
      %s26 = sphi 0, %s24
      %s36 = sphi 0, %s38
      %s39 = sphi 0, %s36
      %s40 = sphi 0, %s39
      %s56 = sphi 0, %s40
      %s62 = sphi 0, %s64
      %s65 = sphi 0, %s62
      %s66 = sphi 0, %s65
      %s82 = sphi 0, %s66
      %s90 = sphi 0, %s92
      %s93 = sphi 0, %s90
      %s94 = sphi 0, %s93
      %s110 = sphi 0, %s94
      %s118 = sphi 0, %s120
      %s121 = sphi 0, %s118
      %s122 = sphi 0, %s121
      %s138 = sphi 0, %s122
      %s146 = sphi 0, %s148
      %s149 = sphi 0, %s146
      %s150 = sphi 0, %s149
      %s166 = sphi 0, %s150
    $region4: #{multi_label_contrastive_forward.7} parent=1 // loop_header_branch
      %17 = sbr.rel (%p15) target = $region8
    $region5: #{multi_label_contrastive_forward.7} parent=1 // loop_body
      %s19 = ssub.s32 %s14, 1
      %s20 = ssub.s32 %s14, 2
      %s27 = sadd.s32 1, %s22
      %p28 = scmp.ge.s32.totalorder %s27, 2
      %s29 = scalar_select %p28, 0, %s27
      %s30 = sadd.s32 1, %s21
      %s31 = scalar_select %p28, %s30, %s21
      %p32 = scmp.ge.s32.totalorder %s31, 2
      %s33 = scalar_select %p32, 0, %s31
      %s34 = ssub.s32 %s21, %s33
      %p35 = scmp.eq.s32.totalorder %s34, 0
      %s37 = sadd.s32 %s36, 1
      %s38 = scalar_select %p35, %s36, %s37
      %p41 = pneg %p35
      %p42 = scmp.eq.s32.totalorder %s14, 3
      %p43 = por %p41, %p42
      %p44 = scmp.ne.s32.totalorder %s36, %s39
      %p45 = scmp.eq.s32.totalorder %s14, 0
      %p46 = por %p44, %p45
      %p47 = scmp.ne.s32.totalorder %s36, %s39
      %p48 = scmp.eq.s32.totalorder %s19, 3
      %p49 = por %p47, %p48
      %p50 = scmp.ne.s32.totalorder %s39, %s40
      %p51 = scmp.eq.s32.totalorder %s19, 0
      %p52 = por %p50, %p51
      %p53 = scmp.ne.s32.totalorder %s39, %s40
      %p54 = scmp.eq.s32.totalorder %s20, 3
      %p55 = por %p53, %p54
      %p57 = scmp.ne.s32.totalorder %s40, %s56
      %p58 = scmp.eq.s32.totalorder %s20, 0
      %p59 = por %p57, %p58
      %s60 = ssub.s32 %s22, %s29
      %p61 = scmp.eq.s32.totalorder %s60, 0
      %s63 = sadd.s32 %s62, 1
      %s64 = scalar_select %p61, %s62, %s63
      %p67 = pneg %p61
      %p68 = scmp.eq.s32.totalorder %s14, 3
      %p69 = por %p67, %p68
      %p70 = scmp.ne.s32.totalorder %s62, %s65
      %p71 = scmp.eq.s32.totalorder %s14, 0
      %p72 = por %p70, %p71
      %p73 = scmp.ne.s32.totalorder %s62, %s65
      %p74 = scmp.eq.s32.totalorder %s19, 3
      %p75 = por %p73, %p74
      %p76 = scmp.ne.s32.totalorder %s65, %s66
      %p77 = scmp.eq.s32.totalorder %s19, 0
      %p78 = por %p76, %p77
      %p79 = scmp.ne.s32.totalorder %s65, %s66
      %p80 = scmp.eq.s32.totalorder %s20, 3
      %p81 = por %p79, %p80
      %p83 = scmp.ne.s32.totalorder %s66, %s82
      %p84 = scmp.eq.s32.totalorder %s20, 0
      %p85 = por %p83, %p84
      %s86 = ssub.s32 %s21, %s33
      %s87 = ssub.s32 %s22, %s29
      %s88 = sor.u32 %s86, %s87
      %p89 = scmp.eq.s32.totalorder %s88, 0
      %s91 = sadd.s32 %s90, 1
      %s92 = scalar_select %p89, %s90, %s91
      %p95 = pneg %p89
      %p96 = scmp.eq.s32.totalorder %s14, 3
      %p97 = por %p95, %p96
      %p98 = scmp.ne.s32.totalorder %s90, %s93
      %p99 = scmp.eq.s32.totalorder %s14, 0
      %p100 = por %p98, %p99
      %p101 = scmp.ne.s32.totalorder %s90, %s93
      %p102 = scmp.eq.s32.totalorder %s19, 3
      %p103 = por %p101, %p102
      %p104 = scmp.ne.s32.totalorder %s93, %s94
      %p105 = scmp.eq.s32.totalorder %s19, 0
      %p106 = por %p104, %p105
      %p107 = scmp.ne.s32.totalorder %s93, %s94
      %p108 = scmp.eq.s32.totalorder %s20, 3
      %p109 = por %p107, %p108
      %p111 = scmp.ne.s32.totalorder %s94, %s110
      %p112 = scmp.eq.s32.totalorder %s20, 0
      %p113 = por %p111, %p112
      %s114 = ssub.s32 %s21, %s33
      %s115 = ssub.s32 %s22, %s29
      %s116 = sor.u32 %s114, %s115
      %p117 = scmp.eq.s32.totalorder %s116, 0
      %s119 = sadd.s32 %s118, 1
      %s120 = scalar_select %p117, %s118, %s119
      %p123 = pneg %p117
      %p124 = scmp.eq.s32.totalorder %s14, 3
      %p125 = por %p123, %p124
      %p126 = scmp.ne.s32.totalorder %s118, %s121
      %p127 = scmp.eq.s32.totalorder %s14, 0
      %p128 = por %p126, %p127
      %p129 = scmp.ne.s32.totalorder %s118, %s121
      %p130 = scmp.eq.s32.totalorder %s19, 3
      %p131 = por %p129, %p130
      %p132 = scmp.ne.s32.totalorder %s121, %s122
      %p133 = scmp.eq.s32.totalorder %s19, 0
      %p134 = por %p132, %p133
      %p135 = scmp.ne.s32.totalorder %s121, %s122
      %p136 = scmp.eq.s32.totalorder %s20, 3
      %p137 = por %p135, %p136
      %p139 = scmp.ne.s32.totalorder %s122, %s138
      %p140 = scmp.eq.s32.totalorder %s20, 0
      %p141 = por %p139, %p140
      %s142 = ssub.s32 %s21, %s33
      %s143 = ssub.s32 %s22, %s29
      %s144 = sor.u32 %s142, %s143
      %p145 = scmp.eq.s32.totalorder %s144, 0
      %s147 = sadd.s32 %s146, 1
      %s148 = scalar_select %p145, %s146, %s147
      %p151 = pneg %p145
      %p152 = scmp.eq.s32.totalorder %s14, 3
      %p153 = por %p151, %p152
      %p154 = scmp.ne.s32.totalorder %s146, %s149
      %p155 = scmp.eq.s32.totalorder %s14, 0
      %p156 = por %p154, %p155
      %p157 = scmp.ne.s32.totalorder %s146, %s149
      %p158 = scmp.eq.s32.totalorder %s19, 3
      %p159 = por %p157, %p158
      %p160 = scmp.ne.s32.totalorder %s149, %s150
      %p161 = scmp.eq.s32.totalorder %s19, 0
      %p162 = por %p160, %p161
      %p163 = scmp.ne.s32.totalorder %s149, %s150
      %p164 = scmp.eq.s32.totalorder %s20, 3
      %p165 = por %p163, %p164
      %p167 = scmp.ne.s32.totalorder %s150, %s166
      %p168 = scmp.eq.s32.totalorder %s20, 0
      %p169 = por %p167, %p168
      %p170 = scmp.le.s32.totalorder 1, %s14
      %p171 = scmp.lt.s32.totalorder %s14, 5
      %p172 = pnand %p170, %p171
      %p173 = pneg %p172
      // Predicated region
      $region9: #{multi_label_contrastive_forward.7} parent=5 // pred_check
        _
      $region10: #{multi_label_contrastive_forward.7} parent=5 // pred_check_branch
        %175 = sbr.rel (%p172) target = $region12
      $region11: #{multi_label_contrastive_forward.7} parent=5 // pred_region
        %s176 = ssub.s32 %s14, 1
      $region12: #{multi_label_contrastive_forward.7} parent=5 // pred_fallthru
        _
      %p177 = scmp.lt.s32.totalorder %s14, 4
      // Predicated region
      $region13: #{multi_label_contrastive_forward.7} parent=5 // pred_check
        %p178 = pneg %p177
      $region14: #{multi_label_contrastive_forward.7} parent=5 // pred_check_branch
        %180 = sbr.rel (%p178) target = $region16
      $region15: #{multi_label_contrastive_forward.7} parent=5 // pred_region
        // Predicated region
        $region17: #{multi_label_contrastive_forward.7} parent=15 // pred_check
          %p181 = pneg %p46
        $region18: #{multi_label_contrastive_forward.7} parent=15 // pred_check_branch
          %183 = sbr.rel (%p181) target = $region20
        $region19: #{multi_label_contrastive_forward.7} parent=15 // pred_region
          %p184 = scmp.lt.s32.totalorder %s21, 1
          %s185 = scalar_select %p184, %s21, 1
          %s186 = smul.addr %s185, 4
          %s187 = scalar_lea.vmem %s0, %s186
        $region20: #{multi_label_contrastive_forward.7} parent=15 // pred_fallthru
          _
        // Predicated region
        $region21: #{multi_label_contrastive_forward.7} parent=15 // pred_check
          %p188 = pneg %p72
        $region22: #{multi_label_contrastive_forward.7} parent=15 // pred_check_branch
          %190 = sbr.rel (%p188) target = $region24
        $region23: #{multi_label_contrastive_forward.7} parent=15 // pred_region
          %s191 = sand.u32 %s62, 1
          %s192 = scalar_lea.sflag [#allocation3], %s191
          %s193 = sand.u32 %s62, 1
          %s194 = smul.addr %s193, 24
          %s195 = scalar_lea.vmem [#allocation2], %s194
          %197 = vsyncadd %s192, 0
          %s198 = smul.addr %s22, 4
          %s199 = scalar_lea.hbm %s1, %s198
          %s200 = sshll.u32 %s199, 4
          %s201 = int_to_ptr.hbm [resolvable:$true] %s200
          %s202 = sshll.u32 %s195, 4
          %s203 = int_to_ptr.vmem [resolvable:$true] %s202
          %208 = dma.hbm_to_vmem [thread:$0]  %s201, 384, %s203, %s192, 128, 64, 4
        $region24: #{multi_label_contrastive_forward.7} parent=15 // pred_fallthru
          _
      $region16: #{multi_label_contrastive_forward.7} parent=5 // pred_fallthru
        _
      %p209 = scmp.le.s32.totalorder 1, %s14
      %p210 = scmp.lt.s32.totalorder %s14, 5
      %p211 = pnand %p209, %p210
      %p212 = pneg %p211
      // Predicated region
      $region25: #{multi_label_contrastive_forward.7} parent=5 // pred_check
        _
      $region26: #{multi_label_contrastive_forward.7} parent=5 // pred_check_branch
        %214 = sbr.rel (%p211) target = $region28
      $region27: #{multi_label_contrastive_forward.7} parent=5 // pred_region
        %s215 = ssub.s32 %s14, 1
        %s216 = sand.u32 %s65, 1
        %s217 = scalar_lea.sflag [#allocation3], %s216
        %s218 = sand.u32 %s65, 1
        %s219 = smul.addr %s218, 24
        %s220 = scalar_lea.vmem [#allocation2], %s219
        // Predicated region
        $region29: #{multi_label_contrastive_forward.7} parent=27 // pred_check
          %p221 = pneg %p78
        $region30: #{multi_label_contrastive_forward.7} parent=27 // pred_check_branch
          %223 = sbr.rel (%p221) target = $region32
        $region31: #{multi_label_contrastive_forward.7} parent=27 // pred_region
          %225 = dma.done %s217, 384
        $region32: #{multi_label_contrastive_forward.7} parent=27 // pred_fallthru
          _
        %p226 = scmp.lt.s32.totalorder %s23, 1
        %s227 = scalar_select %p226, %s23, 1
        %s228 = smul.addr %s227, 4
        %s229 = scalar_lea.vmem %s0, %s228
        %p230 = pneg %p52
        %p231 = pneg %p49
        %s232 = sand.u32 %s65, 1
        %s233 = scalar_lea.sflag [#allocation3], %s232
        %s234 = sand.u32 %s65, 1
        %s235 = smul.addr %s234, 24
        %s236 = scalar_lea.vmem [#allocation2], %s235
        %p237 = pneg %p78
        %p238 = pneg %p75
        %p239 = pneg %p106
        %p240 = pneg %p103
        %p241 = scmp.lt.s32.totalorder %s23, 1
        %s242 = scalar_select %p241, %s23, 1
        %p243 = scmp.lt.s32.totalorder %s24, 1
        %s244 = scalar_select %p243, %s24, 1
        %s245 = smul.addr %s242, 2
        %s246 = sadd.s32 %s244, %s245
        %s247 = smul.addr %s246, 4
        %s248 = scalar_lea.vmem %s2, %s247
        %p249 = pneg %p134
        %p250 = pneg %p131
        %p251 = scmp.lt.s32.totalorder %s23, 1
        %s252 = scalar_select %p251, %s23, 1
        %p253 = scmp.lt.s32.totalorder %s24, 1
        %s254 = scalar_select %p253, %s24, 1
        %s255 = smul.addr %s252, 2
        %s256 = sadd.s32 %s254, %s255
        %s257 = scalar_lea.vmem %s3, %s256
        %p258 = pneg %p162
        %p259 = pneg %p159
        %p260 = scmp.lt.s32.totalorder %s23, 1
        %s261 = scalar_select %p260, %s23, 1
        %p262 = scmp.lt.s32.totalorder %s24, 1
        %s263 = scalar_select %p262, %s24, 1
        %s264 = smul.addr %s261, 2
        %s265 = sadd.s32 %s263, %s264
        %s266 = scalar_lea.vmem %s4, %s265
        %p267 = scmp.lt.s32.totalorder %s23, 1
        %s268 = scalar_select %p267, %s23, 1
        %s269 = smul.addr %s268, 4
        %s270 = scalar_lea.vmem %s0, %s269
        %p271 = scmp.lt.s32.totalorder %s23, 1
        %s272 = scalar_select %p271, %s23, 1
        %p273 = scmp.lt.s32.totalorder %s24, 1
        %s274 = scalar_select %p273, %s24, 1
        %s275 = smul.addr %s272, 2
        %s276 = sadd.s32 %s274, %s275
        %s277 = smul.addr %s276, 4
        %s278 = scalar_lea.vmem %s2, %s277
        %p279 = scmp.lt.s32.totalorder %s23, 1
        %s280 = scalar_select %p279, %s23, 1
        %p281 = scmp.lt.s32.totalorder %s24, 1
        %s282 = scalar_select %p281, %s24, 1
        %s283 = smul.addr %s280, 2
        %s284 = sadd.s32 %s282, %s283
        %s285 = scalar_lea.vmem %s3, %s284
        %p286 = scmp.lt.s32.totalorder %s23, 1
        %s287 = scalar_select %p286, %s23, 1
        %p288 = scmp.lt.s32.totalorder %s24, 1
        %s289 = scalar_select %p288, %s24, 1
        %s290 = smul.addr %s287, 2
        %s291 = sadd.s32 %s289, %s290
        %s292 = scalar_lea.vmem %s4, %s291
        %v294 = vld [vmem:[%s270] sm:$0xf]
        %v295 = vld [vmem:[%s220] sm:$0xf]
        %v296 = vld [vmem:[%s220 + $0x4] sm:$0xf]
        %v297 = vld [vmem:[%s220 + $0x8] sm:$0xf]
        %v298 = vld [vmem:[%s220 + $0xc] sm:$0xf]
        %v299 = vld [vmem:[%s220 + $0x10] sm:$0xf]
        %v300 = vld [vmem:[%s220 + $0x14] sm:$0xf]
        %v307 = vunpack.c.l.b16 %v295
        %v308 = vunpack.c.l.b16 %v296
        %v309 = vunpack.c.l.b16 %v297
        %v310 = vunpack.c.l.b16 %v298
        %v311 = vunpack.c.l.b16 %v299
        %v312 = vunpack.c.l.b16 %v300
        %v313 = vpack.c.b16 %v308, %v307
        %v314 = vpack.c.b16 %v310, %v309
        %v315 = vpack.c.b16 %v312, %v311
        %vm319 = vcmask 392192
        %v321 = vsel %vm319, %v294, 0
        %323 = vmatpush.bf16.msra.mxu0 0
        %324 = vmatpush.bf16.msra.mxu0 0
        %325 = vmatpush.bf16.msra.mxu0 0
        %326 = vmatpush.bf16.msra.mxu0 0
        %327 = vmatpush.bf16.msra.mxu0 0
        %328 = vmatpush.bf16.msra.mxu0 %v315
        %329 = vmatpush.bf16.msra.mxu0 %v314
        %330 = vmatpush.bf16.msra.mxu0 %v313
        %331 = vmatmul.bf16.gmra.mxu0 %v321
        %v332 = vpop.f32.mrf.mxu0
        %v333 = vadd.f32 0.0, %v332
        %v334 = vpop.f32.mrf.mxu0
        %335 = vdwg.mxu0
        %v336 = vpack.c.bf16 %v333, %v333
        %337 = vst [vmem:[%s278] sm:$0xf] %v336
        %v338 = vrot.slane %v333, 4
        %v339 = vadd.f32 %v333, %v338
        %v340 = vrot.slane %v339, 2
        %v341 = vadd.f32 %v339, %v340
        %v342 = vrot.slane %v341, 1
        %v343 = vadd.f32 %v341, %v342
        %344 = vst [vmem:[%s285] sm:$0x1] %v343
        %v345 = vmul.f32 %v333, %v333
        %v346 = vrot.slane %v345, 4
        %v347 = vadd.f32 %v345, %v346
        %v348 = vrot.slane %v347, 2
        %v349 = vadd.f32 %v347, %v348
        %v350 = vrot.slane %v349, 1
        %v351 = vadd.f32 %v349, %v350
        %352 = vst [vmem:[%s292] sm:$0x1] %v351
        %p353 = scmp.lt.s32.totalorder %s23, 1
        %s354 = scalar_select %p353, %s23, 1
        %p355 = scmp.lt.s32.totalorder %s24, 1
        %s356 = scalar_select %p355, %s24, 1
        %s357 = smul.addr %s354, 2
        %s358 = sadd.s32 %s356, %s357
        %s359 = smul.addr %s358, 4
        %s360 = scalar_lea.vmem %s2, %s359
        %p361 = scmp.lt.s32.totalorder %s23, 1
        %s362 = scalar_select %p361, %s23, 1
        %p363 = scmp.lt.s32.totalorder %s24, 1
        %s364 = scalar_select %p363, %s24, 1
        %s365 = smul.addr %s362, 2
        %s366 = sadd.s32 %s364, %s365
        %s367 = scalar_lea.vmem %s3, %s366
        %p368 = scmp.lt.s32.totalorder %s23, 1
        %s369 = scalar_select %p368, %s23, 1
        %p370 = scmp.lt.s32.totalorder %s24, 1
        %s371 = scalar_select %p370, %s24, 1
        %s372 = smul.addr %s369, 2
        %s373 = sadd.s32 %s371, %s372
        %s374 = scalar_lea.vmem %s4, %s373
        // Predicated region
        $region33: #{multi_label_contrastive_forward.7} parent=27 // pred_check
          %p375 = pneg %p103
        $region34: #{multi_label_contrastive_forward.7} parent=27 // pred_check_branch
          %377 = sbr.rel (%p375) target = $region36
        $region35: #{multi_label_contrastive_forward.7} parent=27 // pred_region
          _
        $region36: #{multi_label_contrastive_forward.7} parent=27 // pred_fallthru
          _
        // Predicated region
        $region37: #{multi_label_contrastive_forward.7} parent=27 // pred_check
          %p378 = pneg %p131
        $region38: #{multi_label_contrastive_forward.7} parent=27 // pred_check_branch
          %380 = sbr.rel (%p378) target = $region40
        $region39: #{multi_label_contrastive_forward.7} parent=27 // pred_region
          _
        $region40: #{multi_label_contrastive_forward.7} parent=27 // pred_fallthru
          _
        // Predicated region
        $region41: #{multi_label_contrastive_forward.7} parent=27 // pred_check
          %p381 = pneg %p159
        $region42: #{multi_label_contrastive_forward.7} parent=27 // pred_check_branch
          %383 = sbr.rel (%p381) target = $region44
        $region43: #{multi_label_contrastive_forward.7} parent=27 // pred_region
          _
        $region44: #{multi_label_contrastive_forward.7} parent=27 // pred_fallthru
          _
      $region28: #{multi_label_contrastive_forward.7} parent=5 // pred_fallthru
        _
      %p384 = scmp.le.s32.totalorder 2, %s14
      // Predicated region
      $region45: #{multi_label_contrastive_forward.7} parent=5 // pred_check
        %p385 = pneg %p384
      $region46: #{multi_label_contrastive_forward.7} parent=5 // pred_check_branch
        %387 = sbr.rel (%p385) target = $region48
      $region47: #{multi_label_contrastive_forward.7} parent=5 // pred_region
        %s388 = ssub.s32 %s14, 2
        // Predicated region
        $region49: #{multi_label_contrastive_forward.7} parent=47 // pred_check
          %p389 = pneg %p109
        $region50: #{multi_label_contrastive_forward.7} parent=47 // pred_check_branch
          %391 = sbr.rel (%p389) target = $region52
        $region51: #{multi_label_contrastive_forward.7} parent=47 // pred_region
          %p392 = scmp.lt.s32.totalorder %s25, 1
          %s393 = scalar_select %p392, %s25, 1
          %p394 = scmp.lt.s32.totalorder %s26, 1
          %s395 = scalar_select %p394, %s26, 1
          %s396 = smul.addr %s393, 2
          %s397 = sadd.s32 %s395, %s396
          %s398 = smul.addr %s397, 4
          %s399 = scalar_lea.vmem %s2, %s398
        $region52: #{multi_label_contrastive_forward.7} parent=47 // pred_fallthru
          _
        // Predicated region
        $region53: #{multi_label_contrastive_forward.7} parent=47 // pred_check
          %p400 = pneg %p137
        $region54: #{multi_label_contrastive_forward.7} parent=47 // pred_check_branch
          %402 = sbr.rel (%p400) target = $region56
        $region55: #{multi_label_contrastive_forward.7} parent=47 // pred_region
          %p403 = scmp.lt.s32.totalorder %s25, 1
          %s404 = scalar_select %p403, %s25, 1
          %p405 = scmp.lt.s32.totalorder %s26, 1
          %s406 = scalar_select %p405, %s26, 1
          %s407 = smul.addr %s404, 2
          %s408 = sadd.s32 %s406, %s407
          %s409 = scalar_lea.vmem %s3, %s408
        $region56: #{multi_label_contrastive_forward.7} parent=47 // pred_fallthru
          _
        // Predicated region
        $region57: #{multi_label_contrastive_forward.7} parent=47 // pred_check
          %p410 = pneg %p165
        $region58: #{multi_label_contrastive_forward.7} parent=47 // pred_check_branch
          %412 = sbr.rel (%p410) target = $region60
        $region59: #{multi_label_contrastive_forward.7} parent=47 // pred_region
          %p413 = scmp.lt.s32.totalorder %s25, 1
          %s414 = scalar_select %p413, %s25, 1
          %p415 = scmp.lt.s32.totalorder %s26, 1
          %s416 = scalar_select %p415, %s26, 1
          %s417 = smul.addr %s414, 2
          %s418 = sadd.s32 %s416, %s417
          %s419 = scalar_lea.vmem %s4, %s418
        $region60: #{multi_label_contrastive_forward.7} parent=47 // pred_fallthru
          _
      $region48: #{multi_label_contrastive_forward.7} parent=5 // pred_fallthru
        _
    $region6: #{multi_label_contrastive_forward.7} parent=1 // loop_footer
      %s18 = sadd.s32 1, %s14
    $region7: #{multi_label_contrastive_forward.7} parent=1 // loop_footer_branch
      %13 = sbr.rel target = $region3
    $region8: #{multi_label_contrastive_forward.7} parent=1 // loop_exit
      _
    %420 = vsyncpa [#allocation3], 1
    %s421 = scalar_lea.sflag [#allocation3], 1
    %422 = vsyncpa %s421, 1

// kernel: multi_label_contrastive_forward.8
$region0: #{multi_label_contrastive_forward.8}
  #allocation0 [shape = 'u32[]', space=smem, size = 0x4, offset = 0x4, fixed_abs, tag = 'smem constant byte address 0x4 - core index']
  #allocation1 [shape = 'u32[72,128]{1,0:T(1,128)}', space=vmem, size = 0x9000, scoped, tag = 'internal scratch']
  #allocation2 [shape = 'f32[8,128]{1,0:T(8,128)}', space=vmem, size = 0x1000, scoped, tag = 'scratch operand']
  #allocation3 [shape = 'f32[1]{0:T(128)S(6)}', space=smem, size = 0x200, scoped, tag = 'scoped memory for multi_label_contrastive_forward.8']
  %s0 = inlined_call_operand.vmem [shape: bf16[16,256], index: 0, kind: input, shape index: {}]
  %s1 = inlined_call_operand.vmem [shape: f32[1,256], index: 1, kind: input, shape index: {}]
  %s2 = inlined_call_operand.vmem [shape: f32[1,256], index: 2, kind: input, shape index: {}]
  %s3 = inlined_call_operand.vmem [shape: bf16[256,128], index: 3, kind: input, shape index: {}]
  %s4 = inlined_call_operand.vmem [shape: f32[1,128], index: 4, kind: input, shape index: {}]
  %s5 = inlined_call_operand.<no memory space> [shape: f32[1], index: 5, kind: input, shape index: {}]
  %s6 = inlined_call_operand.vmem [shape: bf16[16,128], index: 6, kind: output, shape index: {}]
  %s7 = sld [smem:[#allocation0]]
  $region65: #{multi_label_contrastive_forward.8} parent=0
    _
  %s9 = ssub.s32 1, %s7
  %s10 = scalar_select 0, %s9, %s7
  %11 = sst [smem:[#allocation3]] %s5
  loop: start=0, step=1, limit=6
  $region2: #{multi_label_contrastive_forward.8} parent=0 // loop_pre_header
    _
  $region3: #{multi_label_contrastive_forward.8} parent=0 // loop_header
    %s13 = sphi 0, %s17
    %p14 = scmp.ge.s32.totalorder %s13, 6
    %s20 = sphi 0, %s32
    %s21 = sphi 0, %s28
    %s22 = sphi 0, %s20
    %s23 = sphi 0, %s21
    %s24 = sphi 0, %s22
    %s25 = sphi 0, %s23
    %s37 = sphi 0, %s39
    %s40 = sphi 0, %s37
    %s41 = sphi 0, %s40
    %s57 = sphi 0, %s41
    %s63 = sphi 0, %s65
    %s66 = sphi 0, %s63
    %s67 = sphi 0, %s66
    %s83 = sphi 0, %s67
    %s89 = sphi 0, %s91
    %s92 = sphi 0, %s89
    %s93 = sphi 0, %s92
    %s109 = sphi 0, %s93
    %s115 = sphi 0, %s117
    %s118 = sphi 0, %s115
    %s119 = sphi 0, %s118
    %s135 = sphi 0, %s119
    %s139 = sphi 0, %s139
    %s141 = sphi 0, %s139
    %s142 = sphi 0, %s141
    %s156 = sphi 0, %s142
    %s160 = sphi 0, %s160
    %s162 = sphi 0, %s160
    %s163 = sphi 0, %s162
    %s177 = sphi 0, %s163
    %s183 = sphi 0, %s185
    %s186 = sphi 0, %s183
    %s187 = sphi 0, %s186
    %s203 = sphi 0, %s187
  $region4: #{multi_label_contrastive_forward.8} parent=0 // loop_header_branch
    %16 = sbr.rel (%p14) target = $region8
  $region5: #{multi_label_contrastive_forward.8} parent=0 // loop_body
    %s18 = ssub.s32 %s13, 1
    %s19 = ssub.s32 %s13, 2
    %s26 = sadd.s32 1, %s21
    %p27 = scmp.ge.s32.totalorder %s26, 2
    %s28 = scalar_select %p27, 0, %s26
    %s29 = sadd.s32 1, %s20
    %s30 = scalar_select %p27, %s29, %s20
    %p31 = scmp.ge.s32.totalorder %s30, 2
    %s32 = scalar_select %p31, 0, %s30
    %s33 = ssub.s32 %s20, %s32
    %s34 = ssub.s32 %s21, %s28
    %s35 = sor.u32 %s33, %s34
    %p36 = scmp.eq.s32.totalorder %s35, 0
    %s38 = sadd.s32 %s37, 1
    %s39 = scalar_select %p36, %s37, %s38
    %p42 = pneg %p36
    %p43 = scmp.eq.s32.totalorder %s13, 3
    %p44 = por %p42, %p43
    %p45 = scmp.ne.s32.totalorder %s37, %s40
    %p46 = scmp.eq.s32.totalorder %s13, 0
    %p47 = por %p45, %p46
    %p48 = scmp.ne.s32.totalorder %s37, %s40
    %p49 = scmp.eq.s32.totalorder %s18, 3
    %p50 = por %p48, %p49
    %p51 = scmp.ne.s32.totalorder %s40, %s41
    %p52 = scmp.eq.s32.totalorder %s18, 0
    %p53 = por %p51, %p52
    %p54 = scmp.ne.s32.totalorder %s40, %s41
    %p55 = scmp.eq.s32.totalorder %s19, 3
    %p56 = por %p54, %p55
    %p58 = scmp.ne.s32.totalorder %s41, %s57
    %p59 = scmp.eq.s32.totalorder %s19, 0
    %p60 = por %p58, %p59
    %s61 = ssub.s32 %s21, %s28
    %p62 = scmp.eq.s32.totalorder %s61, 0
    %s64 = sadd.s32 %s63, 1
    %s65 = scalar_select %p62, %s63, %s64
    %p68 = pneg %p62
    %p69 = scmp.eq.s32.totalorder %s13, 3
    %p70 = por %p68, %p69
    %p71 = scmp.ne.s32.totalorder %s63, %s66
    %p72 = scmp.eq.s32.totalorder %s13, 0
    %p73 = por %p71, %p72
    %p74 = scmp.ne.s32.totalorder %s63, %s66
    %p75 = scmp.eq.s32.totalorder %s18, 3
    %p76 = por %p74, %p75
    %p77 = scmp.ne.s32.totalorder %s66, %s67
    %p78 = scmp.eq.s32.totalorder %s18, 0
    %p79 = por %p77, %p78
    %p80 = scmp.ne.s32.totalorder %s66, %s67
    %p81 = scmp.eq.s32.totalorder %s19, 3
    %p82 = por %p80, %p81
    %p84 = scmp.ne.s32.totalorder %s67, %s83
    %p85 = scmp.eq.s32.totalorder %s19, 0
    %p86 = por %p84, %p85
    %s87 = ssub.s32 %s21, %s28
    %p88 = scmp.eq.s32.totalorder %s87, 0
    %s90 = sadd.s32 %s89, 1
    %s91 = scalar_select %p88, %s89, %s90
    %p94 = pneg %p88
    %p95 = scmp.eq.s32.totalorder %s13, 3
    %p96 = por %p94, %p95
    %p97 = scmp.ne.s32.totalorder %s89, %s92
    %p98 = scmp.eq.s32.totalorder %s13, 0
    %p99 = por %p97, %p98
    %p100 = scmp.ne.s32.totalorder %s89, %s92
    %p101 = scmp.eq.s32.totalorder %s18, 3
    %p102 = por %p100, %p101
    %p103 = scmp.ne.s32.totalorder %s92, %s93
    %p104 = scmp.eq.s32.totalorder %s18, 0
    %p105 = por %p103, %p104
    %p106 = scmp.ne.s32.totalorder %s92, %s93
    %p107 = scmp.eq.s32.totalorder %s19, 3
    %p108 = por %p106, %p107
    %p110 = scmp.ne.s32.totalorder %s93, %s109
    %p111 = scmp.eq.s32.totalorder %s19, 0
    %p112 = por %p110, %p111
    %s113 = ssub.s32 %s21, %s28
    %p114 = scmp.eq.s32.totalorder %s113, 0
    %s116 = sadd.s32 %s115, 1
    %s117 = scalar_select %p114, %s115, %s116
    %p120 = pneg %p114
    %p121 = scmp.eq.s32.totalorder %s13, 3
    %p122 = por %p120, %p121
    %p123 = scmp.ne.s32.totalorder %s115, %s118
    %p124 = scmp.eq.s32.totalorder %s13, 0
    %p125 = por %p123, %p124
    %p126 = scmp.ne.s32.totalorder %s115, %s118
    %p127 = scmp.eq.s32.totalorder %s18, 3
    %p128 = por %p126, %p127
    %p129 = scmp.ne.s32.totalorder %s118, %s119
    %p130 = scmp.eq.s32.totalorder %s18, 0
    %p131 = por %p129, %p130
    %p132 = scmp.ne.s32.totalorder %s118, %s119
    %p133 = scmp.eq.s32.totalorder %s19, 3
    %p134 = por %p132, %p133
    %p136 = scmp.ne.s32.totalorder %s119, %s135
    %p137 = scmp.eq.s32.totalorder %s19, 0
    %p138 = por %p136, %p137
    %s140 = sadd.s32 %s139, 1
    %p143 = scmp.eq.s32.totalorder %s13, 3
    %p144 = scmp.ne.s32.totalorder %s139, %s141
    %p145 = scmp.eq.s32.totalorder %s13, 0
    %p146 = por %p144, %p145
    %p147 = scmp.ne.s32.totalorder %s139, %s141
    %p148 = scmp.eq.s32.totalorder %s18, 3
    %p149 = por %p147, %p148
    %p150 = scmp.ne.s32.totalorder %s141, %s142
    %p151 = scmp.eq.s32.totalorder %s18, 0
    %p152 = por %p150, %p151
    %p153 = scmp.ne.s32.totalorder %s141, %s142
    %p154 = scmp.eq.s32.totalorder %s19, 3
    %p155 = por %p153, %p154
    %p157 = scmp.ne.s32.totalorder %s142, %s156
    %p158 = scmp.eq.s32.totalorder %s19, 0
    %p159 = por %p157, %p158
    %s161 = sadd.s32 %s160, 1
    %p164 = scmp.eq.s32.totalorder %s13, 3
    %p165 = scmp.ne.s32.totalorder %s160, %s162
    %p166 = scmp.eq.s32.totalorder %s13, 0
    %p167 = por %p165, %p166
    %p168 = scmp.ne.s32.totalorder %s160, %s162
    %p169 = scmp.eq.s32.totalorder %s18, 3
    %p170 = por %p168, %p169
    %p171 = scmp.ne.s32.totalorder %s162, %s163
    %p172 = scmp.eq.s32.totalorder %s18, 0
    %p173 = por %p171, %p172
    %p174 = scmp.ne.s32.totalorder %s162, %s163
    %p175 = scmp.eq.s32.totalorder %s19, 3
    %p176 = por %p174, %p175
    %p178 = scmp.ne.s32.totalorder %s163, %s177
    %p179 = scmp.eq.s32.totalorder %s19, 0
    %p180 = por %p178, %p179
    %s181 = ssub.s32 %s20, %s32
    %p182 = scmp.eq.s32.totalorder %s181, 0
    %s184 = sadd.s32 %s183, 1
    %s185 = scalar_select %p182, %s183, %s184
    %p188 = pneg %p182
    %p189 = scmp.eq.s32.totalorder %s13, 3
    %p190 = por %p188, %p189
    %p191 = scmp.ne.s32.totalorder %s183, %s186
    %p192 = scmp.eq.s32.totalorder %s13, 0
    %p193 = por %p191, %p192
    %p194 = scmp.ne.s32.totalorder %s183, %s186
    %p195 = scmp.eq.s32.totalorder %s18, 3
    %p196 = por %p194, %p195
    %p197 = scmp.ne.s32.totalorder %s186, %s187
    %p198 = scmp.eq.s32.totalorder %s18, 0
    %p199 = por %p197, %p198
    %p200 = scmp.ne.s32.totalorder %s186, %s187
    %p201 = scmp.eq.s32.totalorder %s19, 3
    %p202 = por %p200, %p201
    %p204 = scmp.ne.s32.totalorder %s187, %s203
    %p205 = scmp.eq.s32.totalorder %s19, 0
    %p206 = por %p204, %p205
    %p207 = scmp.le.s32.totalorder 1, %s13
    %p208 = scmp.lt.s32.totalorder %s13, 5
    %p209 = pnand %p207, %p208
    %p210 = pneg %p209
    // Predicated region
    $region9: #{multi_label_contrastive_forward.8} parent=5 // pred_check
      _
    $region10: #{multi_label_contrastive_forward.8} parent=5 // pred_check_branch
      %212 = sbr.rel (%p209) target = $region12
    $region11: #{multi_label_contrastive_forward.8} parent=5 // pred_region
      %s213 = ssub.s32 %s13, 1
      // Predicated region
      $region13: #{multi_label_contrastive_forward.8} parent=11 // pred_check
        %p214 = pneg %p152
      $region14: #{multi_label_contrastive_forward.8} parent=11 // pred_check_branch
        %216 = sbr.rel (%p214) target = $region16
      $region15: #{multi_label_contrastive_forward.8} parent=11 // pred_region
        _
      $region16: #{multi_label_contrastive_forward.8} parent=11 // pred_fallthru
        _
      // Predicated region
      $region17: #{multi_label_contrastive_forward.8} parent=11 // pred_check
        %p217 = pneg %p173
      $region18: #{multi_label_contrastive_forward.8} parent=11 // pred_check_branch
        %219 = sbr.rel (%p217) target = $region20
      $region19: #{multi_label_contrastive_forward.8} parent=11 // pred_region
        _
      $region20: #{multi_label_contrastive_forward.8} parent=11 // pred_fallthru
        _
    $region12: #{multi_label_contrastive_forward.8} parent=5 // pred_fallthru
      _
    %p220 = scmp.lt.s32.totalorder %s13, 4
    // Predicated region
    $region21: #{multi_label_contrastive_forward.8} parent=5 // pred_check
      %p221 = pneg %p220
    $region22: #{multi_label_contrastive_forward.8} parent=5 // pred_check_branch
      %223 = sbr.rel (%p221) target = $region24
    $region23: #{multi_label_contrastive_forward.8} parent=5 // pred_region
      // Predicated region
      $region25: #{multi_label_contrastive_forward.8} parent=23 // pred_check
        %p224 = pneg %p47
      $region26: #{multi_label_contrastive_forward.8} parent=23 // pred_check_branch
        %226 = sbr.rel (%p224) target = $region28
      $region27: #{multi_label_contrastive_forward.8} parent=23 // pred_region
        %p227 = scmp.lt.s32.totalorder %s20, 1
        %s228 = scalar_select %p227, %s20, 1
        %p229 = scmp.lt.s32.totalorder %s21, 1
        %s230 = scalar_select %p229, %s21, 1
        %s231 = smul.addr %s228, 2
        %s232 = sadd.s32 %s230, %s231
        %s233 = smul.addr %s232, 4
        %s234 = scalar_lea.vmem %s0, %s233
      $region28: #{multi_label_contrastive_forward.8} parent=23 // pred_fallthru
        _
      // Predicated region
      $region29: #{multi_label_contrastive_forward.8} parent=23 // pred_check
        %p235 = pneg %p73
      $region30: #{multi_label_contrastive_forward.8} parent=23 // pred_check_branch
        %237 = sbr.rel (%p235) target = $region32
      $region31: #{multi_label_contrastive_forward.8} parent=23 // pred_region
        %p238 = scmp.lt.s32.totalorder %s21, 1
        %s239 = scalar_select %p238, %s21, 1
        %s240 = scalar_lea.vmem %s1, %s239
      $region32: #{multi_label_contrastive_forward.8} parent=23 // pred_fallthru
        _
      // Predicated region
      $region33: #{multi_label_contrastive_forward.8} parent=23 // pred_check
        %p241 = pneg %p99
      $region34: #{multi_label_contrastive_forward.8} parent=23 // pred_check_branch
        %243 = sbr.rel (%p241) target = $region36
      $region35: #{multi_label_contrastive_forward.8} parent=23 // pred_region
        %p244 = scmp.lt.s32.totalorder %s21, 1
        %s245 = scalar_select %p244, %s21, 1
        %s246 = scalar_lea.vmem %s2, %s245
      $region36: #{multi_label_contrastive_forward.8} parent=23 // pred_fallthru
        _
      // Predicated region
      $region37: #{multi_label_contrastive_forward.8} parent=23 // pred_check
        %p247 = pneg %p125
      $region38: #{multi_label_contrastive_forward.8} parent=23 // pred_check_branch
        %249 = sbr.rel (%p247) target = $region40
      $region39: #{multi_label_contrastive_forward.8} parent=23 // pred_region
        %s250 = smul.u32 16, %s21
        %p251 = scmp.lt.s32.totalorder %s250, 31
        %s252 = scalar_select %p251, %s250, 31
        %s253 = smul.addr %s252, 4
        %s254 = scalar_lea.vmem %s3, %s253
        %s255 = smul.u32 16, %s21
      $region40: #{multi_label_contrastive_forward.8} parent=23 // pred_fallthru
        _
    $region24: #{multi_label_contrastive_forward.8} parent=5 // pred_fallthru
      _
    %p256 = scmp.le.s32.totalorder 1, %s13
    %p257 = scmp.lt.s32.totalorder %s13, 5
    %p258 = pnand %p256, %p257
    %p259 = pneg %p258
    // Predicated region
    $region41: #{multi_label_contrastive_forward.8} parent=5 // pred_check
      _
    $region42: #{multi_label_contrastive_forward.8} parent=5 // pred_check_branch
      %261 = sbr.rel (%p258) target = $region44
    $region43: #{multi_label_contrastive_forward.8} parent=5 // pred_region
      %s262 = ssub.s32 %s13, 1
      %p263 = scmp.lt.s32.totalorder %s22, 1
      %s264 = scalar_select %p263, %s22, 1
      %p265 = scmp.lt.s32.totalorder %s23, 1
      %s266 = scalar_select %p265, %s23, 1
      %s267 = smul.addr %s264, 2
      %s268 = sadd.s32 %s266, %s267
      %s269 = smul.addr %s268, 4
      %s270 = scalar_lea.vmem %s0, %s269
      %p271 = pneg %p53
      %p272 = pneg %p50
      %p273 = scmp.lt.s32.totalorder %s23, 1
      %s274 = scalar_select %p273, %s23, 1
      %s275 = scalar_lea.vmem %s1, %s274
      %p276 = pneg %p79
      %p277 = pneg %p76
      %p278 = scmp.lt.s32.totalorder %s23, 1
      %s279 = scalar_select %p278, %s23, 1
      %s280 = scalar_lea.vmem %s2, %s279
      %p281 = pneg %p105
      %p282 = pneg %p102
      %s283 = smul.u32 16, %s23
      %p284 = scmp.lt.s32.totalorder %s283, 31
      %s285 = scalar_select %p284, %s283, 31
      %s286 = smul.addr %s285, 4
      %s287 = scalar_lea.vmem %s3, %s286
      %p288 = pneg %p131
      %p289 = pneg %p128
      %p290 = pneg %p152
      %p291 = pneg %p149
      %p292 = pneg %p173
      %p293 = pneg %p170
      %p294 = pneg %p199
      %p295 = pneg %p196
      %p296 = scmp.lt.s32.totalorder %s22, 1
      %s297 = scalar_select %p296, %s22, 1
      %s298 = smul.addr %s297, 4
      %s299 = scalar_lea.vmem %s6, %s298
      %p300 = scmp.lt.s32.totalorder %s22, 1
      %s301 = scalar_select %p300, %s22, 1
      %p302 = scmp.lt.s32.totalorder %s23, 1
      %s303 = scalar_select %p302, %s23, 1
      %s304 = smul.addr %s301, 2
      %s305 = sadd.s32 %s303, %s304
      %s306 = smul.addr %s305, 4
      %s307 = scalar_lea.vmem %s0, %s306
      %p308 = scmp.lt.s32.totalorder %s23, 1
      %s309 = scalar_select %p308, %s23, 1
      %s310 = scalar_lea.vmem %s1, %s309
      %p311 = scmp.lt.s32.totalorder %s23, 1
      %s312 = scalar_select %p311, %s23, 1
      %s313 = scalar_lea.vmem %s2, %s312
      %s314 = smul.u32 16, %s23
      %p315 = scmp.lt.s32.totalorder %s314, 31
      %s316 = scalar_select %p315, %s314, 31
      %s317 = smul.addr %s316, 4
      %s318 = scalar_lea.vmem %s3, %s317
      %s319 = smul.u32 16, %s23
      %p320 = scmp.lt.s32.totalorder %s22, 1
      %s321 = scalar_select %p320, %s22, 1
      %s322 = smul.addr %s321, 4
      %s323 = scalar_lea.vmem %s6, %s322
      %p324 = scmp.eq.s32.totalorder %s23, 0
      // Predicated region
      $region45: #{multi_label_contrastive_forward.8} parent=43 // pred_check
        %p325 = pneg %p324
      $region46: #{multi_label_contrastive_forward.8} parent=43 // pred_check_branch
        %327 = sbr.rel (%p325) target = $region48
      $region47: #{multi_label_contrastive_forward.8} parent=43 // pred_region
        %328 = vst [vmem:[#allocation2] sm:$0xff] 0.0
      $region48: #{multi_label_contrastive_forward.8} parent=43 // pred_fallthru
        _
      %v329 = vld [vmem:[%s307] sm:$0xf]
      %v330 = vunpack.c.l.bf16 %v329
      %v331 = vld [vmem:[%s310] sm:$0x1]
      %v333 = vperm.slane %v331, 0
      %v335 = vmul.f32 %v330, %v333
      %v336 = vld [vmem:[%s313] sm:$0x1]
      %v338 = vperm.slane %v336, 0
      %v340 = vadd.f32 %v335, %v338
      %v341 = vmax.f32 %v340, 0.0
      %v342 = vld [vmem:[#allocation2] sm:$0xff]
      %v343 = vpack.c.bf16 %v341, %v341
      %v344 = vld [vmem:[%s318] sm:$0xf]
      %v345 = vld [vmem:[%s318 + $0x4] sm:$0xf]
      %v346 = vld [vmem:[%s318 + $0x8] sm:$0xf]
      %v347 = vld [vmem:[%s318 + $0xc] sm:$0xf]
      %v348 = vld [vmem:[%s318 + $0x10] sm:$0xf]
      %v349 = vld [vmem:[%s318 + $0x14] sm:$0xf]
      %v350 = vld [vmem:[%s318 + $0x18] sm:$0xf]
      %v351 = vld [vmem:[%s318 + $0x1c] sm:$0xf]
      %v352 = vld [vmem:[%s318 + $0x20] sm:$0xf]
      %v353 = vld [vmem:[%s318 + $0x24] sm:$0xf]
      %v354 = vld [vmem:[%s318 + $0x28] sm:$0xf]
      %v355 = vld [vmem:[%s318 + $0x2c] sm:$0xf]
      %v356 = vld [vmem:[%s318 + $0x30] sm:$0xf]
      %v357 = vld [vmem:[%s318 + $0x34] sm:$0xf]
      %v358 = vld [vmem:[%s318 + $0x38] sm:$0xf]
      %v359 = vld [vmem:[%s318 + $0x3c] sm:$0xf]
      %v376 = vunpack.c.l.b16 %v344
      %v377 = vunpack.c.l.b16 %v345
      %v378 = vunpack.c.l.b16 %v346
      %v379 = vunpack.c.l.b16 %v347
      %v380 = vunpack.c.l.b16 %v348
      %v381 = vunpack.c.l.b16 %v349
      %v382 = vunpack.c.l.b16 %v350
      %v383 = vunpack.c.l.b16 %v351
      %v384 = vunpack.c.l.b16 %v352
      %v385 = vunpack.c.l.b16 %v353
      %v386 = vunpack.c.l.b16 %v354
      %v387 = vunpack.c.l.b16 %v355
      %v388 = vunpack.c.l.b16 %v356
      %v389 = vunpack.c.l.b16 %v357
      %v390 = vunpack.c.l.b16 %v358
      %v391 = vunpack.c.l.b16 %v359
      %v392 = vpack.c.b16 %v377, %v376
      %v393 = vpack.c.b16 %v379, %v378
      %v394 = vpack.c.b16 %v381, %v380
      %v395 = vpack.c.b16 %v383, %v382
      %v396 = vpack.c.b16 %v385, %v384
      %v397 = vpack.c.b16 %v387, %v386
      %v398 = vpack.c.b16 %v389, %v388
      %v399 = vpack.c.b16 %v391, %v390
      %408 = vmatpush.bf16.msra.mxu0 %v399
      %409 = vmatpush.bf16.msra.mxu0 %v398
      %410 = vmatpush.bf16.msra.mxu0 %v397
      %411 = vmatpush.bf16.msra.mxu0 %v396
      %412 = vmatpush.bf16.msra.mxu0 %v395
      %413 = vmatpush.bf16.msra.mxu0 %v394
      %414 = vmatpush.bf16.msra.mxu0 %v393
      %415 = vmatpush.bf16.msra.mxu0 %v392
      %416 = vmatmul.bf16.gmra.mxu0 %v343
      %v417 = vpop.f32.mrf.mxu0
      %v418 = vadd.f32 0.0, %v417
      %v419 = vpop.f32.mrf.mxu0
      %420 = vdwg.mxu0
      %v421 = vadd.f32 %v342, %v418
      %422 = vst [vmem:[#allocation2] sm:$0xff] %v421
      %p423 = scmp.eq.s32.totalorder %s23, 1
      // Predicated region
      $region49: #{multi_label_contrastive_forward.8} parent=43 // pred_check
        %p424 = pneg %p423
      $region50: #{multi_label_contrastive_forward.8} parent=43 // pred_check_branch
        %426 = sbr.rel (%p424) target = $region52
      $region51: #{multi_label_contrastive_forward.8} parent=43 // pred_region
        %v427 = vld [vmem:[#allocation2] sm:$0xff]
        %v428 = vld [vmem:[%s4] sm:$0x1]
        %v430 = vperm.slane %v428, 0
        %v432 = vadd.f32 %v427, %v430
        %v433 = vmul.f32 %v432, %v432
        %434 = vadd.xlane.f32.xlu0 %v433
        %v435 = vpop.xlane.xlu0 %434
        %v436 = vmax.f32 %v435, 1e-24
        %v437 = vrsqrt.pop %v436
        %v438 = vmul.f32 %v437, %v436
        %v439 = vmul.f32 %v438, %v437
        %v440 = vmul.f32 0.5, %v439
        %v441 = vsub.f32 1.5, %v440
        %v442 = vmul.f32 %v437, %v441
        %vm443 = vweird.f32 %v436
        %vm444 = vweird.f32 %v437
        %vm445 = vmor %vm443, %vm444
        %v446 = vsel %vm445, %v437, %v442
        %v447 = vmul.f32 %v432, %v446
        %s448 = sld [smem:[#allocation3]]
        %v449 = vstv %s448
        %v450 = vmul.f32 %v447, %v449
        %v451 = vpack.c.bf16 %v450, %v450
        %452 = vst [vmem:[%s323] sm:$0xf] %v451
      $region52: #{multi_label_contrastive_forward.8} parent=43 // pred_fallthru
        _
      %p453 = scmp.lt.s32.totalorder %s22, 1
      %s454 = scalar_select %p453, %s22, 1
      %s455 = smul.addr %s454, 4
      %s456 = scalar_lea.vmem %s6, %s455
      // Predicated region
      $region53: #{multi_label_contrastive_forward.8} parent=43 // pred_check
        %p457 = pneg %p196
      $region54: #{multi_label_contrastive_forward.8} parent=43 // pred_check_branch
        %459 = sbr.rel (%p457) target = $region56
      $region55: #{multi_label_contrastive_forward.8} parent=43 // pred_region
        _
      $region56: #{multi_label_contrastive_forward.8} parent=43 // pred_fallthru
        _
    $region44: #{multi_label_contrastive_forward.8} parent=5 // pred_fallthru
      _
    %p460 = scmp.le.s32.totalorder 2, %s13
    // Predicated region
    $region57: #{multi_label_contrastive_forward.8} parent=5 // pred_check
      %p461 = pneg %p460
    $region58: #{multi_label_contrastive_forward.8} parent=5 // pred_check_branch
      %463 = sbr.rel (%p461) target = $region60
    $region59: #{multi_label_contrastive_forward.8} parent=5 // pred_region
      %s464 = ssub.s32 %s13, 2
      // Predicated region
      $region61: #{multi_label_contrastive_forward.8} parent=59 // pred_check
        %p465 = pneg %p202
      $region62: #{multi_label_contrastive_forward.8} parent=59 // pred_check_branch
        %467 = sbr.rel (%p465) target = $region64
      $region63: #{multi_label_contrastive_forward.8} parent=59 // pred_region
        %p468 = scmp.lt.s32.totalorder %s24, 1
        %s469 = scalar_select %p468, %s24, 1
        %s470 = smul.addr %s469, 4
        %s471 = scalar_lea.vmem %s6, %s470
      $region64: #{multi_label_contrastive_forward.8} parent=59 // pred_fallthru
        _
    $region60: #{multi_label_contrastive_forward.8} parent=5 // pred_fallthru
      _
  $region6: #{multi_label_contrastive_forward.8} parent=0 // loop_footer
    %s17 = sadd.s32 1, %s13
  $region7: #{multi_label_contrastive_forward.8} parent=0 // loop_footer_branch
    %12 = sbr.rel target = $region3
  $region8: #{multi_label_contrastive_forward.8} parent=0 // loop_exit
    _

// kernel: multi_label_contrastive_forward.9
$region0: #{multi_label_contrastive_forward.9}
  #allocation0 [shape = 'u32[]', space=smem, size = 0x4, offset = 0x4, fixed_abs, tag = 'smem constant byte address 0x4 - core index']
  #allocation1 [shape = 'u32[72,128]{1,0:T(1,128)}', space=vmem, size = 0x9000, scoped, tag = 'internal scratch']
  #allocation2 [shape = 'f32[8,1]{1,0:T(8,128)}', space=vmem, size = 0x1000, scoped, tag = 'scratch operand']
  #allocation3 [shape = 'f32[8,1]{1,0:T(8,128)}', space=vmem, size = 0x1000, scoped, tag = 'scratch operand']
  #allocation4 [shape = 'f32[2,8]{1,0:T(2,128)}', space=vmem, size = 0x400, scoped, tag = 'scratch operand']
  #allocation5 [shape = 'f32[2,8]{1,0:T(2,128)}', space=vmem, size = 0x400, scoped, tag = 'scratch operand']
  #allocation6 [shape = 'f32[2]{0:T(128)}', space=smem, size = 0x200, scoped, tag = 'scratch operand']
  %s0 = inlined_call_operand.vmem [shape: bf16[16,128], index: 0, kind: input, shape index: {}]
  %s1 = inlined_call_operand.vmem [shape: bf16[16,128], index: 1, kind: input, shape index: {}]
  %s2 = inlined_call_operand.hbm [shape: f32[1,1], index: 2, kind: output, shape index: {}]
  %s3 = sld [smem:[#allocation0]]
  $region61: #{multi_label_contrastive_forward.9} parent=0
    _
  %s5 = ssub.s32 1, %s3
  %s6 = scalar_select 0, %s5, %s3
  $region1: #{multi_label_contrastive_forward.9} parent=0
    #allocation7 [shape = 'u8[512]{0}', space=smem, size = 0x200, scoped, tag = 'output window, operand 0, single buffered']
    #allocation8 [shape = 's32[2]{0}', space=sflag, size = 0x8, scoped, tag = 'scoped memory for multi_label_contrastive_forward.9']
    %7 = vsyncpa [#allocation8], 0
    loop: start=0, step=1, limit=6
    $region2: #{multi_label_contrastive_forward.9} parent=1 // loop_pre_header
      _
    $region3: #{multi_label_contrastive_forward.9} parent=1 // loop_header
      %s9 = sphi 0, %s13
      %p10 = scmp.ge.s32.totalorder %s9, 6
      %s16 = sphi 0, %s28
      %s17 = sphi 0, %s24
      %s18 = sphi 0, %s16
      %s19 = sphi 0, %s17
      %s20 = sphi 0, %s18
      %s21 = sphi 0, %s19
      %s31 = sphi 0, %s33
      %s34 = sphi 0, %s31
      %s35 = sphi 0, %s34
      %s51 = sphi 0, %s35
      %s57 = sphi 0, %s59
      %s60 = sphi 0, %s57
      %s61 = sphi 0, %s60
      %s77 = sphi 0, %s61
      %s81 = sphi 0, %s81
      %s83 = sphi 0, %s81
      %s84 = sphi 0, %s83
      %s98 = sphi 0, %s84
    $region4: #{multi_label_contrastive_forward.9} parent=1 // loop_header_branch
      %12 = sbr.rel (%p10) target = $region8
    $region5: #{multi_label_contrastive_forward.9} parent=1 // loop_body
      %s14 = ssub.s32 %s9, 1
      %s15 = ssub.s32 %s9, 2
      %s22 = sadd.s32 1, %s17
      %p23 = scmp.ge.s32.totalorder %s22, 2
      %s24 = scalar_select %p23, 0, %s22
      %s25 = sadd.s32 1, %s16
      %s26 = scalar_select %p23, %s25, %s16
      %p27 = scmp.ge.s32.totalorder %s26, 2
      %s28 = scalar_select %p27, 0, %s26
      %s29 = ssub.s32 %s16, %s28
      %p30 = scmp.eq.s32.totalorder %s29, 0
      %s32 = sadd.s32 %s31, 1
      %s33 = scalar_select %p30, %s31, %s32
      %p36 = pneg %p30
      %p37 = scmp.eq.s32.totalorder %s9, 3
      %p38 = por %p36, %p37
      %p39 = scmp.ne.s32.totalorder %s31, %s34
      %p40 = scmp.eq.s32.totalorder %s9, 0
      %p41 = por %p39, %p40
      %p42 = scmp.ne.s32.totalorder %s31, %s34
      %p43 = scmp.eq.s32.totalorder %s14, 3
      %p44 = por %p42, %p43
      %p45 = scmp.ne.s32.totalorder %s34, %s35
      %p46 = scmp.eq.s32.totalorder %s14, 0
      %p47 = por %p45, %p46
      %p48 = scmp.ne.s32.totalorder %s34, %s35
      %p49 = scmp.eq.s32.totalorder %s15, 3
      %p50 = por %p48, %p49
      %p52 = scmp.ne.s32.totalorder %s35, %s51
      %p53 = scmp.eq.s32.totalorder %s15, 0
      %p54 = por %p52, %p53
      %s55 = ssub.s32 %s17, %s24
      %p56 = scmp.eq.s32.totalorder %s55, 0
      %s58 = sadd.s32 %s57, 1
      %s59 = scalar_select %p56, %s57, %s58
      %p62 = pneg %p56
      %p63 = scmp.eq.s32.totalorder %s9, 3
      %p64 = por %p62, %p63
      %p65 = scmp.ne.s32.totalorder %s57, %s60
      %p66 = scmp.eq.s32.totalorder %s9, 0
      %p67 = por %p65, %p66
      %p68 = scmp.ne.s32.totalorder %s57, %s60
      %p69 = scmp.eq.s32.totalorder %s14, 3
      %p70 = por %p68, %p69
      %p71 = scmp.ne.s32.totalorder %s60, %s61
      %p72 = scmp.eq.s32.totalorder %s14, 0
      %p73 = por %p71, %p72
      %p74 = scmp.ne.s32.totalorder %s60, %s61
      %p75 = scmp.eq.s32.totalorder %s15, 3
      %p76 = por %p74, %p75
      %p78 = scmp.ne.s32.totalorder %s61, %s77
      %p79 = scmp.eq.s32.totalorder %s15, 0
      %p80 = por %p78, %p79
      %s82 = sadd.s32 %s81, 1
      %p85 = scmp.eq.s32.totalorder %s9, 3
      %p86 = scmp.ne.s32.totalorder %s81, %s83
      %p87 = scmp.eq.s32.totalorder %s9, 0
      %p88 = por %p86, %p87
      %p89 = scmp.ne.s32.totalorder %s81, %s83
      %p90 = scmp.eq.s32.totalorder %s14, 3
      %p91 = por %p89, %p90
      %p92 = scmp.ne.s32.totalorder %s83, %s84
      %p93 = scmp.eq.s32.totalorder %s14, 0
      %p94 = por %p92, %p93
      %p95 = scmp.ne.s32.totalorder %s83, %s84
      %p96 = scmp.eq.s32.totalorder %s15, 3
      %p97 = por %p95, %p96
      %p99 = scmp.ne.s32.totalorder %s84, %s98
      %p100 = scmp.eq.s32.totalorder %s15, 0
      %p101 = por %p99, %p100
      %p102 = scmp.le.s32.totalorder 1, %s9
      %p103 = scmp.lt.s32.totalorder %s9, 5
      %p104 = pnand %p102, %p103
      %p105 = pneg %p104
      // Predicated region
      $region9: #{multi_label_contrastive_forward.9} parent=5 // pred_check
        _
      $region10: #{multi_label_contrastive_forward.9} parent=5 // pred_check_branch
        %107 = sbr.rel (%p104) target = $region12
      $region11: #{multi_label_contrastive_forward.9} parent=5 // pred_region
        %s108 = ssub.s32 %s9, 1
      $region12: #{multi_label_contrastive_forward.9} parent=5 // pred_fallthru
        _
      %p109 = scmp.lt.s32.totalorder %s9, 4
      // Predicated region
      $region13: #{multi_label_contrastive_forward.9} parent=5 // pred_check
        %p110 = pneg %p109
      $region14: #{multi_label_contrastive_forward.9} parent=5 // pred_check_branch
        %112 = sbr.rel (%p110) target = $region16
      $region15: #{multi_label_contrastive_forward.9} parent=5 // pred_region
        // Predicated region
        $region17: #{multi_label_contrastive_forward.9} parent=15 // pred_check
          %p113 = pneg %p41
        $region18: #{multi_label_contrastive_forward.9} parent=15 // pred_check_branch
          %115 = sbr.rel (%p113) target = $region20
        $region19: #{multi_label_contrastive_forward.9} parent=15 // pred_region
          %p116 = scmp.lt.s32.totalorder %s16, 1
          %s117 = scalar_select %p116, %s16, 1
          %s118 = smul.addr %s117, 4
          %s119 = scalar_lea.vmem %s0, %s118
        $region20: #{multi_label_contrastive_forward.9} parent=15 // pred_fallthru
          _
        // Predicated region
        $region21: #{multi_label_contrastive_forward.9} parent=15 // pred_check
          %p120 = pneg %p67
        $region22: #{multi_label_contrastive_forward.9} parent=15 // pred_check_branch
          %122 = sbr.rel (%p120) target = $region24
        $region23: #{multi_label_contrastive_forward.9} parent=15 // pred_region
          %p123 = scmp.lt.s32.totalorder %s17, 1
          %s124 = scalar_select %p123, %s17, 1
          %s125 = smul.addr %s124, 4
          %s126 = scalar_lea.vmem %s1, %s125
        $region24: #{multi_label_contrastive_forward.9} parent=15 // pred_fallthru
          _
      $region16: #{multi_label_contrastive_forward.9} parent=5 // pred_fallthru
        _
      %p127 = scmp.le.s32.totalorder 1, %s9
      %p128 = scmp.lt.s32.totalorder %s9, 5
      %p129 = pnand %p127, %p128
      %p130 = pneg %p129
      // Predicated region
      $region25: #{multi_label_contrastive_forward.9} parent=5 // pred_check
        _
      $region26: #{multi_label_contrastive_forward.9} parent=5 // pred_check_branch
        %132 = sbr.rel (%p129) target = $region28
      $region27: #{multi_label_contrastive_forward.9} parent=5 // pred_region
        %s133 = ssub.s32 %s9, 1
        %p134 = scmp.lt.s32.totalorder %s18, 1
        %s135 = scalar_select %p134, %s18, 1
        %s136 = smul.addr %s135, 4
        %s137 = scalar_lea.vmem %s0, %s136
        %p138 = pneg %p47
        %p139 = pneg %p44
        %p140 = scmp.lt.s32.totalorder %s19, 1
        %s141 = scalar_select %p140, %s19, 1
        %s142 = smul.addr %s141, 4
        %s143 = scalar_lea.vmem %s1, %s142
        %p144 = pneg %p73
        %p145 = pneg %p70
        %p146 = pneg %p94
        %p147 = pneg %p91
        %p148 = scmp.lt.s32.totalorder %s18, 1
        %s149 = scalar_select %p148, %s18, 1
        %s150 = smul.addr %s149, 4
        %s151 = scalar_lea.vmem %s0, %s150
        %p152 = scmp.lt.s32.totalorder %s19, 1
        %s153 = scalar_select %p152, %s19, 1
        %s154 = smul.addr %s153, 4
        %s155 = scalar_lea.vmem %s1, %s154
        %p157 = scmp.eq.s32.totalorder %s18, 1
        %p158 = scmp.eq.s32.totalorder %s19, 1
        %p159 = pnand %p157, %p158
        %p160 = pneg %p159
        %p161 = scmp.eq.s32.totalorder %s18, 0
        %p162 = scmp.eq.s32.totalorder %s19, 0
        %p163 = pnand %p161, %p162
        %p164 = pneg %p163
        // Predicated region
        $region29: #{multi_label_contrastive_forward.9} parent=27 // pred_check
          _
        $region30: #{multi_label_contrastive_forward.9} parent=27 // pred_check_branch
          %166 = sbr.rel (%p163) target = $region32
        $region31: #{multi_label_contrastive_forward.9} parent=27 // pred_region
          %vm167 = vcmask 58368
          %168 = vst.msk [vmem:[#allocation4] sm:$0x3] %vm167, -inf
          %169 = vst.msk [vmem:[#allocation5] sm:$0x3] %vm167, 0.0
          %s170 = scalar_lea.smem [#allocation6], 0
          %171 = sst [smem:[%s170]] 0.0
          %s172 = scalar_lea.smem [#allocation6], 1
          %173 = sst [smem:[%s172]] 0.0
        $region32: #{multi_label_contrastive_forward.9} parent=27 // pred_fallthru
          _
        // Predicated region
        $region33: #{multi_label_contrastive_forward.9} parent=27 // pred_check
          %p174 = pneg %p162
        $region34: #{multi_label_contrastive_forward.9} parent=27 // pred_check_branch
          %176 = sbr.rel (%p174) target = $region36
        $region35: #{multi_label_contrastive_forward.9} parent=27 // pred_region
          %vm177 = vcmask 7168
          %178 = vst.msk [vmem:[#allocation2] sm:$0xff] %vm177, -inf
          %179 = vst.msk [vmem:[#allocation3] sm:$0xff] %vm177, 0.0
        $region36: #{multi_label_contrastive_forward.9} parent=27 // pred_fallthru
          _
        %v180 = vld [vmem:[%s151] sm:$0xf]
        %v181 = vld [vmem:[%s155] sm:$0xf]
        %182 = vmatpush.bf16.xpose.msra.mxu0 0
        %183 = vmatpush.bf16.xpose.msra.mxu0 0
        %184 = vmatpush.bf16.xpose.msra.mxu0 0
        %185 = vmatpush.bf16.xpose.msra.mxu0 0
        %186 = vmatpush.bf16.xpose.msra.mxu0 0
        %187 = vmatpush.bf16.xpose.msra.mxu0 0
        %188 = vmatpush.bf16.xpose.msra.mxu0 0
        %189 = vmatpush.bf16.xpose.msra.mxu0 %v181
        %190 = vmatmul.bf16.gmra.mxu0 %v180
        %v191 = vpop.f32.mrf.mxu0
        %v192 = vadd.f32 0.0, %v191
        %v193 = vpop.f32.mrf.mxu0
        %194 = vdwg.mxu0
        %v195 = vld [vmem:[#allocation2] sm:$0xff]
        %vm196 = vcmask 64512
        %v197 = vsel %vm196, %v192, -inf
        %198 = vmax.xlane.f32.xlu0 %v197
        %v199 = vpop.xlane.xlu0 %198
        %v200 = vmax.f32 %v195, %v199
        %v201 = vsub.f32 %v195, %v200
        %v202 = vmul.f32 %v201, 1.442695
        %v203 = vpow.pop %v202
        %v204 = vld [vmem:[#allocation3] sm:$0xff]
        %v205 = vmul.f32 %v203, %v204
        %207 = vset.pattern.permute.xlu0 0
        %208 = vperm.xlu0 %207, %v200
        %v209 = vpop.permute.xlu0 %208
        %v211 = vsub.f32 %v192, %v209
        %v212 = vmul.f32 %v211, 1.442695
        %v213 = vpow.pop %v212
        %v214 = vsel %vm196, %v213, 0.0
        %215 = vadd.xlane.f32.xlu0 %v214
        %v216 = vpop.xlane.xlu0 %215
        %v217 = vadd.f32 %v205, %v216
        %vm218 = vcmask 7168
        %219 = vst.msk [vmem:[#allocation3] sm:$0xff] %vm218, %v217
        %220 = vst.msk [vmem:[#allocation2] sm:$0xff] %vm218, %v200
        %s221 = scalar_lea.vmem [#allocation4], %s19
        %v222 = vld [vmem:[%s221] sm:$0x1]
        %v223 = vrot.slane %v197, 4
        %v224 = vmax.f32 %v197, %v223
        %v225 = vrot.slane %v224, 2
        %v226 = vmax.f32 %v224, %v225
        %v227 = vrot.slane %v226, 1
        %v228 = vmax.f32 %v226, %v227
        %v229 = vmax.f32 %v222, %v228
        %v230 = vsub.f32 %v222, %v229
        %v231 = vmul.f32 %v230, 1.442695
        %v232 = vpow.pop %v231
        %s233 = scalar_lea.vmem [#allocation5], %s19
        %v234 = vld [vmem:[%s233] sm:$0x1]
        %v235 = vmul.f32 %v232, %v234
        %v236 = vperm.slane %v229, 0
        %v237 = vsub.f32 %v192, %v236
        %v238 = vmul.f32 %v237, 1.442695
        %v239 = vpow.pop %v238
        %v240 = vsel %vm196, %v239, 0.0
        %v241 = vrot.slane %v240, 4
        %v242 = vadd.f32 %v240, %v241
        %v243 = vrot.slane %v242, 2
        %v244 = vadd.f32 %v242, %v243
        %v245 = vrot.slane %v244, 1
        %v246 = vadd.f32 %v244, %v245
        %v247 = vadd.f32 %v235, %v246
        %vm248 = vcmask 57344
        %249 = vst.msk [vmem:[%s233] sm:$0x1] %vm248, %v247
        %250 = vst.msk [vmem:[%s221] sm:$0x1] %vm248, %v229
        %p251 = scmp.eq.s32.totalorder %s18, %s19
        // Predicated region
        $region37: #{multi_label_contrastive_forward.9} parent=27 // pred_check
          %p252 = pneg %p251
        $region38: #{multi_label_contrastive_forward.9} parent=27 // pred_check_branch
          %254 = sbr.rel (%p252) target = $region40
        $region39: #{multi_label_contrastive_forward.9} parent=27 // pred_region
          %s255 = sld [smem:[#allocation6 + $0x1]]
          %v256 = vunpack.c.l.bf16 %v180
          %v257 = vunpack.c.l.bf16 %v181
          %v258 = vmul.f32 %v256, %v257
          %259 = vadd.xlane.f32.xlu0 %v258
          %v260 = vpop.xlane.xlu0 %259
          %v261 = vrot.slane %v260, 4
          %v262 = vadd.f32 %v260, %v261
          %v263 = vrot.slane %v262, 2
          %v264 = vadd.f32 %v262, %v263
          %v265 = vrot.slane %v264, 1
          %v266 = vadd.f32 %v264, %v265
          %s267 = vtos %v266
          %s268 = sadd.f32 %s255, %s267
          %s269 = scalar_lea.smem [#allocation6], 1
          %270 = sst [smem:[%s269]] %s268
        $region40: #{multi_label_contrastive_forward.9} parent=27 // pred_fallthru
          _
        // Predicated region
        $region41: #{multi_label_contrastive_forward.9} parent=27 // pred_check
          %p271 = pneg %p158
        $region42: #{multi_label_contrastive_forward.9} parent=27 // pred_check_branch
          %273 = sbr.rel (%p271) target = $region44
        $region43: #{multi_label_contrastive_forward.9} parent=27 // pred_region
          %s274 = sld [smem:[#allocation6]]
          %v275 = vld [vmem:[#allocation2] sm:$0xff]
          %v276 = vld [vmem:[#allocation3] sm:$0xff]
          %v277 = vlog2.pop %v276
          %v278 = vmul.f32 %v277, 0.6931472
          %v279 = vadd.f32 %v275, %v278
          %v280 = vsel %vm218, %v279, 0.0
          %281 = vadd.xlane.f32.xlu0 %v280
          %v282 = vpop.xlane.xlu0 %281
          %v283 = vrot.slane %v282, 4
          %v284 = vadd.f32 %v282, %v283
          %v285 = vrot.slane %v284, 2
          %v286 = vadd.f32 %v284, %v285
          %v287 = vrot.slane %v286, 1
          %v288 = vadd.f32 %v286, %v287
          %s289 = vtos %v288
          %s290 = sadd.f32 %s274, %s289
          %s291 = scalar_lea.smem [#allocation6], 0
          %292 = sst [smem:[%s291]] %s290
        $region44: #{multi_label_contrastive_forward.9} parent=27 // pred_fallthru
          _
        // Predicated region
        $region45: #{multi_label_contrastive_forward.9} parent=27 // pred_check
          _
        $region46: #{multi_label_contrastive_forward.9} parent=27 // pred_check_branch
          %294 = sbr.rel (%p159) target = $region48
        $region47: #{multi_label_contrastive_forward.9} parent=27 // pred_region
          %v295 = vld [vmem:[#allocation4] sm:$0x3]
          %v296 = vld [vmem:[#allocation5] sm:$0x3]
          %v297 = vlog2.pop %v296
          %v298 = vmul.f32 %v297, 0.6931472
          %v299 = vadd.f32 %v295, %v298
          %vm300 = vcmask 58368
          %v301 = vsel %vm300, %v299, 0.0
          %302 = vadd.xlane.f32.xlu0 %v301
          %v303 = vpop.xlane.xlu0 %302
          %v304 = vrot.slane %v303, 4
          %v305 = vadd.f32 %v303, %v304
          %v306 = vrot.slane %v305, 2
          %v307 = vadd.f32 %v305, %v306
          %v308 = vrot.slane %v307, 1
          %v309 = vadd.f32 %v307, %v308
          %s310 = vtos %v309
          %s311 = sld [smem:[#allocation6]]
          %s312 = sadd.f32 %s311, %s310
          %s313 = smul.f32 %s312, 0.5
          %s314 = sld [smem:[#allocation6 + $0x1]]
          %s315 = ssub.f32 %s313, %s314
          %s316 = smul.f32 %s315, 0.0625
          %s317 = scalar_lea.smem [#allocation7], 0
          %318 = sst [smem:[%s317]] %s316
        $region48: #{multi_label_contrastive_forward.9} parent=27 // pred_fallthru
          _
        // Predicated region
        $region49: #{multi_label_contrastive_forward.9} parent=27 // pred_check
          %p319 = pneg %p91
        $region50: #{multi_label_contrastive_forward.9} parent=27 // pred_check_branch
          %321 = sbr.rel (%p319) target = $region52
        $region51: #{multi_label_contrastive_forward.9} parent=27 // pred_region
          %323 = vsyncadd [#allocation8], 0
          %s325 = sshll.u32 %s2, 4
          %s326 = int_to_ptr.hbm [resolvable:$true] %s325
          %328 = dma.smem_to_hbm [#allocation7], 16, %s326, [#allocation8]
        $region52: #{multi_label_contrastive_forward.9} parent=27 // pred_fallthru
          _
        // Predicated region
        $region53: #{multi_label_contrastive_forward.9} parent=27 // pred_check
          %p329 = pneg %p91
        $region54: #{multi_label_contrastive_forward.9} parent=27 // pred_check_branch
          %331 = sbr.rel (%p329) target = $region56
        $region55: #{multi_label_contrastive_forward.9} parent=27 // pred_region
          %333 = dma.done [#allocation8], 16
        $region56: #{multi_label_contrastive_forward.9} parent=27 // pred_fallthru
          _
        %334 = sfence
      $region28: #{multi_label_contrastive_forward.9} parent=5 // pred_fallthru
        _
      %p335 = scmp.le.s32.totalorder 2, %s9
      // Predicated region
      $region57: #{multi_label_contrastive_forward.9} parent=5 // pred_check
        %p336 = pneg %p335
      $region58: #{multi_label_contrastive_forward.9} parent=5 // pred_check_branch
        %338 = sbr.rel (%p336) target = $region60
      $region59: #{multi_label_contrastive_forward.9} parent=5 // pred_region
        %s339 = ssub.s32 %s9, 2
      $region60: #{multi_label_contrastive_forward.9} parent=5 // pred_fallthru
        _
    $region6: #{multi_label_contrastive_forward.9} parent=1 // loop_footer
      %s13 = sadd.s32 1, %s9
    $region7: #{multi_label_contrastive_forward.9} parent=1 // loop_footer_branch
      %8 = sbr.rel target = $region3
    $region8: #{multi_label_contrastive_forward.9} parent=1 // loop_exit
      _
    %340 = vsyncpa [#allocation8], 1
    %s341 = scalar_lea.sflag [#allocation8], 1
    %342 = vsyncpa %s341, 1

</llo_original>
